<compile_context>
chip_gen: v6e
topology: v6e:2x2x1
jax: 0.10.0
libtpu: 0.0.40
codegen_flags: <defaults>
</compile_context>

<pallas_src>
import functools

import jax
import jax.numpy as jnp
import numpy as np
from jax.experimental import pallas as pl
from jax.experimental.pallas import tpu as pltpu


def _round_up(x, m):
    return ((x + m - 1) // m) * m


def lstm_kernel(x_ref, wih_ref, whh_ref, b_ref, out_ref, gx_scr,
                *, seq_len, b_pad):
    """Single-invocation LSTM recurrence.

    x_ref   : (seq_len * b_pad, emb_dim)      embedded tokens, batch padded
    wih_ref : (emb_dim, 4 * h_pad)            gate-padded input weights
    whh_ref : (h_pad,  4 * h_pad)             gate-padded recurrent weights
    b_ref   : (1, 4 * h_pad)                  fused, gate-padded bias
    out_ref : (b_pad, h_pad)                  last-step hidden state h_T
    gx_scr  : (seq_len * b_pad, 4 * h_pad)    precomputed input projections
    """
    h_pad = whh_ref.shape[0]

    # ---- Input projection for every time step in one MXU pass (bias fused,
    #      broadcast happens exactly once, outside the recurrence). ----
    gx_scr[...] = (jnp.dot(x_ref[...], wih_ref[...],
                           preferred_element_type=jnp.float32)
                   + b_ref[...])

    whh = whh_ref[...]  # keep recurrent weights resident in vregs/VMEM

    def step(t, carry):
        h, c = carry
        start = pl.multiple_of(t * b_pad, b_pad)
        gates = (gx_scr[pl.ds(start, b_pad), :]
                 + jnp.dot(h, whh, preferred_element_type=jnp.float32))
        # 128-lane-aligned gate slices (PyTorch order: i, f, g, o).
        i_g = jax.nn.sigmoid(gates[:, 0 * h_pad:1 * h_pad])
        f_g = jax.nn.sigmoid(gates[:, 1 * h_pad:2 * h_pad])
        g_g = jnp.tanh(gates[:, 2 * h_pad:3 * h_pad])
        o_g = jax.nn.sigmoid(gates[:, 3 * h_pad:4 * h_pad])
        c_new = f_g * c + i_g * g_g
        h_new = o_g * jnp.tanh(c_new)
        return (h_new, c_new)

    h0 = jnp.zeros(out_ref.shape, jnp.float32)
    c0 = jnp.zeros(out_ref.shape, jnp.float32)
    h_last, _ = jax.lax.fori_loop(0, seq_len, step, (h0, c0), unroll=True)

    out_ref[...] = h_last  # lane-dense (8, 128) store


@jax.jit
def cnn_title_forward(seq, embedding, w_ih, w_hh, b_ih, b_hh, w_pred, b_pred):
    """seq: int32 (seq_len, batch). Returns float32 (batch, 1)."""
    seq_len, batch = seq.shape
    emb_dim = embedding.shape[1]
    hidden = w_hh.shape[1]                     # w_hh is (4H, H)
    h_pad = _round_up(hidden, 128)             # each gate on a 128-lane boundary
    b_pad = _round_up(max(batch, 8), 8)        # full sublane group

    # ---- Embedding gather (plain JAX glue), pad batch with zeros. ----
    x = jnp.take(embedding, seq, axis=0).astype(jnp.float32)   # (T, B, E)
    x = jnp.zeros((seq_len, b_pad, emb_dim), jnp.float32).at[:, :batch, :].set(x)
    x2 = x.reshape(seq_len * b_pad, emb_dim)                    # (T*Bp, E)

    # ---- Gate-padded weight / bias layout: (.., 4, h_pad) -> (.., 4*h_pad). ----
    wih_pad = (jnp.zeros((emb_dim, 4, h_pad), jnp.float32)
               .at[:, :, :hidden].set(w_ih.T.reshape(emb_dim, 4, hidden))
               .reshape(emb_dim, 4 * h_pad))
    whh_pad = (jnp.zeros((h_pad, 4, h_pad), jnp.float32)
               .at[:hidden, :, :hidden].set(w_hh.T.reshape(hidden, 4, hidden))
               .reshape(h_pad, 4 * h_pad))
    bias_pad = (jnp.zeros((4, h_pad), jnp.float32)
                .at[:, :hidden].set((b_ih + b_hh).reshape(4, hidden))
                .reshape(1, 4 * h_pad))

    kernel = functools.partial(lstm_kernel, seq_len=seq_len, b_pad=b_pad)

    h_last = pl.pallas_call(
        kernel,
        out_shape=jax.ShapeDtypeStruct((b_pad, h_pad), jnp.float32),
        grid=(1,),
        in_specs=[
            pl.BlockSpec((seq_len * b_pad, emb_dim), lambda i: (0, 0)),
            pl.BlockSpec((emb_dim, 4 * h_pad), lambda i: (0, 0)),
            pl.BlockSpec((h_pad, 4 * h_pad), lambda i: (0, 0)),
            pl.BlockSpec((1, 4 * h_pad), lambda i: (0, 0)),
        ],
        out_specs=pl.BlockSpec((b_pad, h_pad), lambda i: (0, 0)),
        scratch_shapes=[
            pltpu.VMEM((seq_len * b_pad, 4 * h_pad), jnp.float32),
        ],
        compiler_params=pltpu.CompilerParams(
            dimension_semantics=("arbitrary",)),
    )(x2, wih_pad, whh_pad, bias_pad)

    # ---- Final Linear(H, 1) on the last hidden state (plain JAX glue). ----
    h_T = h_last[:batch, :hidden]                               # (B, H)
    return h_T @ w_pred.T + b_pred.reshape(1, 1)                # (B, 1)


def reference_forward(seq, embedding, w_ih, w_hh, b_ih, b_hh, w_pred, b_pred):
    """Pure-JAX reference mirroring torch.nn.LSTM + Linear."""
    x = jnp.take(embedding, seq, axis=0)             # (T, B, E)
    hidden = w_hh.shape[1]
    batch = seq.shape[1]
    h0 = jnp.zeros((batch, hidden), jnp.float32)
    c0 = jnp.zeros((batch, hidden), jnp.float32)

    def step(carry, x_t):
        h, c = carry
        gates = x_t @ w_ih.T + h @ w_hh.T + b_ih + b_hh
        i_g = jax.nn.sigmoid(gates[:, 0 * hidden:1 * hidden])
        f_g = jax.nn.sigmoid(gates[:, 1 * hidden:2 * hidden])
        g_g = jnp.tanh(gates[:, 2 * hidden:3 * hidden])
        o_g = jax.nn.sigmoid(gates[:, 3 * hidden:4 * hidden])
        c_new = f_g * c + i_g * g_g
        h_new = o_g * jnp.tanh(c_new)
        return (h_new, c_new), h_new

    (h_T, _), _ = jax.lax.scan(step, (h0, c0), x)
    return h_T @ w_pred.T + b_pred.reshape(1, 1)


if __name__ == "__main__":
    # Small, module-consistent shapes.
    vocab = 500
    emb_dim = 32
    hidden_dim = 32
    seq_len = 8
    batch = 2

    key = jax.random.PRNGKey(0)
    keys = jax.random.split(key, 8)
    scale = 1.0 / np.sqrt(hidden_dim)

    embedding = jax.random.normal(keys[0], (vocab, emb_dim), jnp.float32)
    w_ih = jax.random.uniform(keys[1], (4 * hidden_dim, emb_dim), jnp.float32,
                              -scale, scale)
    w_hh = jax.random.uniform(keys[2], (4 * hidden_dim, hidden_dim), jnp.float32,
                              -scale, scale)
    b_ih = jax.random.uniform(keys[3], (4 * hidden_dim,), jnp.float32, -scale, scale)
    b_hh = jax.random.uniform(keys[4], (4 * hidden_dim,), jnp.float32, -scale, scale)
    w_pred = jax.random.uniform(keys[5], (1, hidden_dim), jnp.float32, -scale, scale)
    b_pred = jax.random.uniform(keys[6], (1,), jnp.float32, -scale, scale)

    seq = jax.random.randint(keys[7], (seq_len, batch), 0, vocab, jnp.int32)

    out = cnn_title_forward(seq, embedding, w_ih, w_hh, b_ih, b_hh, w_pred, b_pred)
    out = jax.block_until_ready(out)

    ref = reference_forward(seq, embedding, w_ih, w_hh, b_ih, b_hh, w_pred, b_pred)
    assert out.shape == (batch, 1), out.shape
    assert np.allclose(np.asarray(out), np.asarray(ref), atol=1e-2, rtol=1e-2), (
        np.asarray(out), np.asarray(ref))

    print("KERNEL_OK")
</pallas_src>

<mosaic_0001>
module attributes {stable_mosaic.version = 11 : i64} {
  func.func @lstm_kernel(%arg0: i32, %arg1: memref<64x32xf32, #tpu.memory_space<vmem>>, %arg2: memref<32x512xf32, #tpu.memory_space<vmem>>, %arg3: memref<128x512xf32, #tpu.memory_space<vmem>>, %arg4: memref<1x512xf32, #tpu.memory_space<vmem>>, %arg5: memref<8x128xf32, #tpu.memory_space<vmem>>, %arg6: memref<64x512xf32, #tpu.memory_space<vmem>>) attributes {dimension_semantics = [#tpu.dimension_semantics<arbitrary>], iteration_bounds = array<i64: 1>, scalar_prefetch = 0 : i64, scratch_operands = 1 : i64, tpu.core_type = #tpu.core_type<tc>, window_params = [{pipeline_mode = #tpu.pipeline_mode<synchronous>, transform_indices = @transform_0, window_bounds = array<i64: 64, 32>}, {pipeline_mode = #tpu.pipeline_mode<synchronous>, transform_indices = @transform_1, window_bounds = array<i64: 32, 512>}, {pipeline_mode = #tpu.pipeline_mode<synchronous>, transform_indices = @transform_2, window_bounds = array<i64: 128, 512>}, {pipeline_mode = #tpu.pipeline_mode<synchronous>, transform_indices = @transform_3, window_bounds = array<i64: 1, 512>}, {pipeline_mode = #tpu.pipeline_mode<synchronous>, transform_indices = @transform_4, window_bounds = array<i64: 8, 128>}]} {
    %c0 = arith.constant 0 : index
    %c0_0 = arith.constant 0 : index
    %0 = vector.load %arg1[%c0, %c0_0] : memref<64x32xf32, #tpu.memory_space<vmem>>, vector<64x32xf32>
    %c0_1 = arith.constant 0 : index
    %c0_2 = arith.constant 0 : index
    %1 = vector.load %arg2[%c0_1, %c0_2] : memref<32x512xf32, #tpu.memory_space<vmem>>, vector<32x512xf32>
    %cst = arith.constant dense<0.000000e+00> : vector<64x512xf32>
    %2 = tpu.matmul %0, %1, %cst {dimension_numbers = #tpu.dot_dimension_numbers<[1], [0], [0], [1], [0, 0, 1, 1], [], []>} : vector<64x32xf32>, vector<32x512xf32>, vector<64x512xf32> -> vector<64x512xf32>
    %c0_3 = arith.constant 0 : index
    %c0_4 = arith.constant 0 : index
    %3 = vector.load %arg4[%c0_3, %c0_4] : memref<1x512xf32, #tpu.memory_space<vmem>>, vector<1x512xf32>
    %4 = vector.broadcast %3 : vector<1x512xf32> to vector<64x512xf32>
    %5 = arith.addf %2, %4 : vector<64x512xf32>
    %c0_5 = arith.constant 0 : index
    %c0_6 = arith.constant 0 : index
    %6 = vector.load %arg6[%c0_5, %c0_6] : memref<64x512xf32, #tpu.memory_space<vmem>>, vector<64x512xf32>
    tpu.vector_store %arg6[%c0_5, %c0_6], %5 {strides = array<i32>} : memref<64x512xf32, #tpu.memory_space<vmem>>, vector<64x512xf32>,
    %c0_7 = arith.constant 0 : index
    %c0_8 = arith.constant 0 : index
    %7 = vector.load %arg3[%c0_7, %c0_8] : memref<128x512xf32, #tpu.memory_space<vmem>>, vector<128x512xf32>
    %cst_9 = arith.constant 0.000000e+00 : f32
    %8 = vector.broadcast %cst_9 : f32 to vector<8x128xf32>
    %cst_10 = arith.constant 0.000000e+00 : f32
    %9 = vector.broadcast %cst_10 : f32 to vector<8x128xf32>
    %c0_i32 = arith.constant 0 : i32
    %c8_i32 = arith.constant 8 : i32
    %10 = arith.muli %c0_i32, %c8_i32 : i32
    %11 = tpu.assume_multiple %10, 8 : i32
    %12 = arith.index_cast %11 : i32 to index
    %c0_11 = arith.constant 0 : index
    %13 = vector.load %arg6[%12, %c0_11] : memref<64x512xf32, #tpu.memory_space<vmem>>, vector<8x512xf32>
    %cst_12 = arith.constant dense<0.000000e+00> : vector<8x512xf32>
    %14 = tpu.matmul %8, %7, %cst_12 {dimension_numbers = #tpu.dot_dimension_numbers<[1], [0], [0], [1], [0, 0, 1, 1], [], []>} : vector<8x128xf32>, vector<128x512xf32>, vector<8x512xf32> -> vector<8x512xf32>
    %15 = arith.addf %13, %14 : vector<8x512xf32>
    %16 = vector.extract_strided_slice %15 {offsets = [0, 0], sizes = [8, 128], strides = [1, 1]} : vector<8x512xf32> to vector<8x128xf32>
    %17 = arith.negf %16 : vector<8x128xf32>
    %18 = math.exp %17 : vector<8x128xf32>
    %cst_13 = arith.constant 1.000000e+00 : f32
    %19 = vector.broadcast %cst_13 : f32 to vector<8x128xf32>
    %20 = arith.addf %19, %18 : vector<8x128xf32>
    %21 = arith.divf %19, %20 : vector<8x128xf32>
    %22 = vector.extract_strided_slice %15 {offsets = [0, 128], sizes = [8, 128], strides = [1, 1]} : vector<8x512xf32> to vector<8x128xf32>
    %23 = arith.negf %22 : vector<8x128xf32>
    %24 = math.exp %23 : vector<8x128xf32>
    %cst_14 = arith.constant 1.000000e+00 : f32
    %25 = vector.broadcast %cst_14 : f32 to vector<8x128xf32>
    %26 = arith.addf %25, %24 : vector<8x128xf32>
    %27 = arith.divf %25, %26 : vector<8x128xf32>
    %28 = vector.extract_strided_slice %15 {offsets = [0, 256], sizes = [8, 128], strides = [1, 1]} : vector<8x512xf32> to vector<8x128xf32>
    %29 = math.tanh %28 : vector<8x128xf32>
    %30 = vector.extract_strided_slice %15 {offsets = [0, 384], sizes = [8, 128], strides = [1, 1]} : vector<8x512xf32> to vector<8x128xf32>
    %31 = arith.negf %30 : vector<8x128xf32>
    %32 = math.exp %31 : vector<8x128xf32>
    %cst_15 = arith.constant 1.000000e+00 : f32
    %33 = vector.broadcast %cst_15 : f32 to vector<8x128xf32>
    %34 = arith.addf %33, %32 : vector<8x128xf32>
    %35 = arith.divf %33, %34 : vector<8x128xf32>
    %36 = arith.mulf %27, %9 : vector<8x128xf32>
    %37 = arith.mulf %21, %29 : vector<8x128xf32>
    %38 = arith.addf %36, %37 : vector<8x128xf32>
    %39 = math.tanh %38 : vector<8x128xf32>
    %40 = arith.mulf %35, %39 : vector<8x128xf32>
    %c1_i32 = arith.constant 1 : i32
    %c8_i32_16 = arith.constant 8 : i32
    %41 = arith.muli %c1_i32, %c8_i32_16 : i32
    %42 = tpu.assume_multiple %41, 8 : i32
    %43 = arith.index_cast %42 : i32 to index
    %c0_17 = arith.constant 0 : index
    %44 = vector.load %arg6[%43, %c0_17] : memref<64x512xf32, #tpu.memory_space<vmem>>, vector<8x512xf32>
    %cst_18 = arith.constant dense<0.000000e+00> : vector<8x512xf32>
    %45 = tpu.matmul %40, %7, %cst_18 {dimension_numbers = #tpu.dot_dimension_numbers<[1], [0], [0], [1], [0, 0, 1, 1], [], []>} : vector<8x128xf32>, vector<128x512xf32>, vector<8x512xf32> -> vector<8x512xf32>
    %46 = arith.addf %44, %45 : vector<8x512xf32>
    %47 = vector.extract_strided_slice %46 {offsets = [0, 0], sizes = [8, 128], strides = [1, 1]} : vector<8x512xf32> to vector<8x128xf32>
    %48 = arith.negf %47 : vector<8x128xf32>
    %49 = math.exp %48 : vector<8x128xf32>
    %cst_19 = arith.constant 1.000000e+00 : f32
    %50 = vector.broadcast %cst_19 : f32 to vector<8x128xf32>
    %51 = arith.addf %50, %49 : vector<8x128xf32>
    %52 = arith.divf %50, %51 : vector<8x128xf32>
    %53 = vector.extract_strided_slice %46 {offsets = [0, 128], sizes = [8, 128], strides = [1, 1]} : vector<8x512xf32> to vector<8x128xf32>
    %54 = arith.negf %53 : vector<8x128xf32>
    %55 = math.exp %54 : vector<8x128xf32>
    %cst_20 = arith.constant 1.000000e+00 : f32
    %56 = vector.broadcast %cst_20 : f32 to vector<8x128xf32>
    %57 = arith.addf %56, %55 : vector<8x128xf32>
    %58 = arith.divf %56, %57 : vector<8x128xf32>
    %59 = vector.extract_strided_slice %46 {offsets = [0, 256], sizes = [8, 128], strides = [1, 1]} : vector<8x512xf32> to vector<8x128xf32>
    %60 = math.tanh %59 : vector<8x128xf32>
    %61 = vector.extract_strided_slice %46 {offsets = [0, 384], sizes = [8, 128], strides = [1, 1]} : vector<8x512xf32> to vector<8x128xf32>
    %62 = arith.negf %61 : vector<8x128xf32>
    %63 = math.exp %62 : vector<8x128xf32>
    %cst_21 = arith.constant 1.000000e+00 : f32
    %64 = vector.broadcast %cst_21 : f32 to vector<8x128xf32>
    %65 = arith.addf %64, %63 : vector<8x128xf32>
    %66 = arith.divf %64, %65 : vector<8x128xf32>
    %67 = arith.mulf %58, %38 : vector<8x128xf32>
    %68 = arith.mulf %52, %60 : vector<8x128xf32>
    %69 = arith.addf %67, %68 : vector<8x128xf32>
    %70 = math.tanh %69 : vector<8x128xf32>
    %71 = arith.mulf %66, %70 : vector<8x128xf32>
    %c2_i32 = arith.constant 2 : i32
    %c8_i32_22 = arith.constant 8 : i32
    %72 = arith.muli %c2_i32, %c8_i32_22 : i32
    %73 = tpu.assume_multiple %72, 8 : i32
    %74 = arith.index_cast %73 : i32 to index
    %c0_23 = arith.constant 0 : index
    %75 = vector.load %arg6[%74, %c0_23] : memref<64x512xf32, #tpu.memory_space<vmem>>, vector<8x512xf32>
    %cst_24 = arith.constant dense<0.000000e+00> : vector<8x512xf32>
    %76 = tpu.matmul %71, %7, %cst_24 {dimension_numbers = #tpu.dot_dimension_numbers<[1], [0], [0], [1], [0, 0, 1, 1], [], []>} : vector<8x128xf32>, vector<128x512xf32>, vector<8x512xf32> -> vector<8x512xf32>
    %77 = arith.addf %75, %76 : vector<8x512xf32>
    %78 = vector.extract_strided_slice %77 {offsets = [0, 0], sizes = [8, 128], strides = [1, 1]} : vector<8x512xf32> to vector<8x128xf32>
    %79 = arith.negf %78 : vector<8x128xf32>
    %80 = math.exp %79 : vector<8x128xf32>
    %cst_25 = arith.constant 1.000000e+00 : f32
    %81 = vector.broadcast %cst_25 : f32 to vector<8x128xf32>
    %82 = arith.addf %81, %80 : vector<8x128xf32>
    %83 = arith.divf %81, %82 : vector<8x128xf32>
    %84 = vector.extract_strided_slice %77 {offsets = [0, 128], sizes = [8, 128], strides = [1, 1]} : vector<8x512xf32> to vector<8x128xf32>
    %85 = arith.negf %84 : vector<8x128xf32>
    %86 = math.exp %85 : vector<8x128xf32>
    %cst_26 = arith.constant 1.000000e+00 : f32
    %87 = vector.broadcast %cst_26 : f32 to vector<8x128xf32>
    %88 = arith.addf %87, %86 : vector<8x128xf32>
    %89 = arith.divf %87, %88 : vector<8x128xf32>
    %90 = vector.extract_strided_slice %77 {offsets = [0, 256], sizes = [8, 128], strides = [1, 1]} : vector<8x512xf32> to vector<8x128xf32>
    %91 = math.tanh %90 : vector<8x128xf32>
    %92 = vector.extract_strided_slice %77 {offsets = [0, 384], sizes = [8, 128], strides = [1, 1]} : vector<8x512xf32> to vector<8x128xf32>
    %93 = arith.negf %92 : vector<8x128xf32>
    %94 = math.exp %93 : vector<8x128xf32>
    %cst_27 = arith.constant 1.000000e+00 : f32
    %95 = vector.broadcast %cst_27 : f32 to vector<8x128xf32>
    %96 = arith.addf %95, %94 : vector<8x128xf32>
    %97 = arith.divf %95, %96 : vector<8x128xf32>
    %98 = arith.mulf %89, %69 : vector<8x128xf32>
    %99 = arith.mulf %83, %91 : vector<8x128xf32>
    %100 = arith.addf %98, %99 : vector<8x128xf32>
    %101 = math.tanh %100 : vector<8x128xf32>
    %102 = arith.mulf %97, %101 : vector<8x128xf32>
    %c3_i32 = arith.constant 3 : i32
    %c8_i32_28 = arith.constant 8 : i32
    %103 = arith.muli %c3_i32, %c8_i32_28 : i32
    %104 = tpu.assume_multiple %103, 8 : i32
    %105 = arith.index_cast %104 : i32 to index
    %c0_29 = arith.constant 0 : index
    %106 = vector.load %arg6[%105, %c0_29] : memref<64x512xf32, #tpu.memory_space<vmem>>, vector<8x512xf32>
    %cst_30 = arith.constant dense<0.000000e+00> : vector<8x512xf32>
    %107 = tpu.matmul %102, %7, %cst_30 {dimension_numbers = #tpu.dot_dimension_numbers<[1], [0], [0], [1], [0, 0, 1, 1], [], []>} : vector<8x128xf32>, vector<128x512xf32>, vector<8x512xf32> -> vector<8x512xf32>
    %108 = arith.addf %106, %107 : vector<8x512xf32>
    %109 = vector.extract_strided_slice %108 {offsets = [0, 0], sizes = [8, 128], strides = [1, 1]} : vector<8x512xf32> to vector<8x128xf32>
    %110 = arith.negf %109 : vector<8x128xf32>
    %111 = math.exp %110 : vector<8x128xf32>
    %cst_31 = arith.constant 1.000000e+00 : f32
    %112 = vector.broadcast %cst_31 : f32 to vector<8x128xf32>
    %113 = arith.addf %112, %111 : vector<8x128xf32>
    %114 = arith.divf %112, %113 : vector<8x128xf32>
    %115 = vector.extract_strided_slice %108 {offsets = [0, 128], sizes = [8, 128], strides = [1, 1]} : vector<8x512xf32> to vector<8x128xf32>
    %116 = arith.negf %115 : vector<8x128xf32>
    %117 = math.exp %116 : vector<8x128xf32>
    %cst_32 = arith.constant 1.000000e+00 : f32
    %118 = vector.broadcast %cst_32 : f32 to vector<8x128xf32>
    %119 = arith.addf %118, %117 : vector<8x128xf32>
    %120 = arith.divf %118, %119 : vector<8x128xf32>
    %121 = vector.extract_strided_slice %108 {offsets = [0, 256], sizes = [8, 128], strides = [1, 1]} : vector<8x512xf32> to vector<8x128xf32>
    %122 = math.tanh %121 : vector<8x128xf32>
    %123 = vector.extract_strided_slice %108 {offsets = [0, 384], sizes = [8, 128], strides = [1, 1]} : vector<8x512xf32> to vector<8x128xf32>
    %124 = arith.negf %123 : vector<8x128xf32>
    %125 = math.exp %124 : vector<8x128xf32>
    %cst_33 = arith.constant 1.000000e+00 : f32
    %126 = vector.broadcast %cst_33 : f32 to vector<8x128xf32>
    %127 = arith.addf %126, %125 : vector<8x128xf32>
    %128 = arith.divf %126, %127 : vector<8x128xf32>
    %129 = arith.mulf %120, %100 : vector<8x128xf32>
    %130 = arith.mulf %114, %122 : vector<8x128xf32>
    %131 = arith.addf %129, %130 : vector<8x128xf32>
    %132 = math.tanh %131 : vector<8x128xf32>
    %133 = arith.mulf %128, %132 : vector<8x128xf32>
    %c4_i32 = arith.constant 4 : i32
    %c8_i32_34 = arith.constant 8 : i32
    %134 = arith.muli %c4_i32, %c8_i32_34 : i32
    %135 = tpu.assume_multiple %134, 8 : i32
    %136 = arith.index_cast %135 : i32 to index
    %c0_35 = arith.constant 0 : index
    %137 = vector.load %arg6[%136, %c0_35] : memref<64x512xf32, #tpu.memory_space<vmem>>, vector<8x512xf32>
    %cst_36 = arith.constant dense<0.000000e+00> : vector<8x512xf32>
    %138 = tpu.matmul %133, %7, %cst_36 {dimension_numbers = #tpu.dot_dimension_numbers<[1], [0], [0], [1], [0, 0, 1, 1], [], []>} : vector<8x128xf32>, vector<128x512xf32>, vector<8x512xf32> -> vector<8x512xf32>
    %139 = arith.addf %137, %138 : vector<8x512xf32>
    %140 = vector.extract_strided_slice %139 {offsets = [0, 0], sizes = [8, 128], strides = [1, 1]} : vector<8x512xf32> to vector<8x128xf32>
    %141 = arith.negf %140 : vector<8x128xf32>
    %142 = math.exp %141 : vector<8x128xf32>
    %cst_37 = arith.constant 1.000000e+00 : f32
    %143 = vector.broadcast %cst_37 : f32 to vector<8x128xf32>
    %144 = arith.addf %143, %142 : vector<8x128xf32>
    %145 = arith.divf %143, %144 : vector<8x128xf32>
    %146 = vector.extract_strided_slice %139 {offsets = [0, 128], sizes = [8, 128], strides = [1, 1]} : vector<8x512xf32> to vector<8x128xf32>
    %147 = arith.negf %146 : vector<8x128xf32>
    %148 = math.exp %147 : vector<8x128xf32>
    %cst_38 = arith.constant 1.000000e+00 : f32
    %149 = vector.broadcast %cst_38 : f32 to vector<8x128xf32>
    %150 = arith.addf %149, %148 : vector<8x128xf32>
    %151 = arith.divf %149, %150 : vector<8x128xf32>
    %152 = vector.extract_strided_slice %139 {offsets = [0, 256], sizes = [8, 128], strides = [1, 1]} : vector<8x512xf32> to vector<8x128xf32>
    %153 = math.tanh %152 : vector<8x128xf32>
    %154 = vector.extract_strided_slice %139 {offsets = [0, 384], sizes = [8, 128], strides = [1, 1]} : vector<8x512xf32> to vector<8x128xf32>
    %155 = arith.negf %154 : vector<8x128xf32>
    %156 = math.exp %155 : vector<8x128xf32>
    %cst_39 = arith.constant 1.000000e+00 : f32
    %157 = vector.broadcast %cst_39 : f32 to vector<8x128xf32>
    %158 = arith.addf %157, %156 : vector<8x128xf32>
    %159 = arith.divf %157, %158 : vector<8x128xf32>
    %160 = arith.mulf %151, %131 : vector<8x128xf32>
    %161 = arith.mulf %145, %153 : vector<8x128xf32>
    %162 = arith.addf %160, %161 : vector<8x128xf32>
    %163 = math.tanh %162 : vector<8x128xf32>
    %164 = arith.mulf %159, %163 : vector<8x128xf32>
    %c5_i32 = arith.constant 5 : i32
    %c8_i32_40 = arith.constant 8 : i32
    %165 = arith.muli %c5_i32, %c8_i32_40 : i32
    %166 = tpu.assume_multiple %165, 8 : i32
    %167 = arith.index_cast %166 : i32 to index
    %c0_41 = arith.constant 0 : index
    %168 = vector.load %arg6[%167, %c0_41] : memref<64x512xf32, #tpu.memory_space<vmem>>, vector<8x512xf32>
    %cst_42 = arith.constant dense<0.000000e+00> : vector<8x512xf32>
    %169 = tpu.matmul %164, %7, %cst_42 {dimension_numbers = #tpu.dot_dimension_numbers<[1], [0], [0], [1], [0, 0, 1, 1], [], []>} : vector<8x128xf32>, vector<128x512xf32>, vector<8x512xf32> -> vector<8x512xf32>
    %170 = arith.addf %168, %169 : vector<8x512xf32>
    %171 = vector.extract_strided_slice %170 {offsets = [0, 0], sizes = [8, 128], strides = [1, 1]} : vector<8x512xf32> to vector<8x128xf32>
    %172 = arith.negf %171 : vector<8x128xf32>
    %173 = math.exp %172 : vector<8x128xf32>
    %cst_43 = arith.constant 1.000000e+00 : f32
    %174 = vector.broadcast %cst_43 : f32 to vector<8x128xf32>
    %175 = arith.addf %174, %173 : vector<8x128xf32>
    %176 = arith.divf %174, %175 : vector<8x128xf32>
    %177 = vector.extract_strided_slice %170 {offsets = [0, 128], sizes = [8, 128], strides = [1, 1]} : vector<8x512xf32> to vector<8x128xf32>
    %178 = arith.negf %177 : vector<8x128xf32>
    %179 = math.exp %178 : vector<8x128xf32>
    %cst_44 = arith.constant 1.000000e+00 : f32
    %180 = vector.broadcast %cst_44 : f32 to vector<8x128xf32>
    %181 = arith.addf %180, %179 : vector<8x128xf32>
    %182 = arith.divf %180, %181 : vector<8x128xf32>
    %183 = vector.extract_strided_slice %170 {offsets = [0, 256], sizes = [8, 128], strides = [1, 1]} : vector<8x512xf32> to vector<8x128xf32>
    %184 = math.tanh %183 : vector<8x128xf32>
    %185 = vector.extract_strided_slice %170 {offsets = [0, 384], sizes = [8, 128], strides = [1, 1]} : vector<8x512xf32> to vector<8x128xf32>
    %186 = arith.negf %185 : vector<8x128xf32>
    %187 = math.exp %186 : vector<8x128xf32>
    %cst_45 = arith.constant 1.000000e+00 : f32
    %188 = vector.broadcast %cst_45 : f32 to vector<8x128xf32>
    %189 = arith.addf %188, %187 : vector<8x128xf32>
    %190 = arith.divf %188, %189 : vector<8x128xf32>
    %191 = arith.mulf %182, %162 : vector<8x128xf32>
    %192 = arith.mulf %176, %184 : vector<8x128xf32>
    %193 = arith.addf %191, %192 : vector<8x128xf32>
    %194 = math.tanh %193 : vector<8x128xf32>
    %195 = arith.mulf %190, %194 : vector<8x128xf32>
    %c6_i32 = arith.constant 6 : i32
    %c8_i32_46 = arith.constant 8 : i32
    %196 = arith.muli %c6_i32, %c8_i32_46 : i32
    %197 = tpu.assume_multiple %196, 8 : i32
    %198 = arith.index_cast %197 : i32 to index
    %c0_47 = arith.constant 0 : index
    %199 = vector.load %arg6[%198, %c0_47] : memref<64x512xf32, #tpu.memory_space<vmem>>, vector<8x512xf32>
    %cst_48 = arith.constant dense<0.000000e+00> : vector<8x512xf32>
    %200 = tpu.matmul %195, %7, %cst_48 {dimension_numbers = #tpu.dot_dimension_numbers<[1], [0], [0], [1], [0, 0, 1, 1], [], []>} : vector<8x128xf32>, vector<128x512xf32>, vector<8x512xf32> -> vector<8x512xf32>
    %201 = arith.addf %199, %200 : vector<8x512xf32>
    %202 = vector.extract_strided_slice %201 {offsets = [0, 0], sizes = [8, 128], strides = [1, 1]} : vector<8x512xf32> to vector<8x128xf32>
    %203 = arith.negf %202 : vector<8x128xf32>
    %204 = math.exp %203 : vector<8x128xf32>
    %cst_49 = arith.constant 1.000000e+00 : f32
    %205 = vector.broadcast %cst_49 : f32 to vector<8x128xf32>
    %206 = arith.addf %205, %204 : vector<8x128xf32>
    %207 = arith.divf %205, %206 : vector<8x128xf32>
    %208 = vector.extract_strided_slice %201 {offsets = [0, 128], sizes = [8, 128], strides = [1, 1]} : vector<8x512xf32> to vector<8x128xf32>
    %209 = arith.negf %208 : vector<8x128xf32>
    %210 = math.exp %209 : vector<8x128xf32>
    %cst_50 = arith.constant 1.000000e+00 : f32
    %211 = vector.broadcast %cst_50 : f32 to vector<8x128xf32>
    %212 = arith.addf %211, %210 : vector<8x128xf32>
    %213 = arith.divf %211, %212 : vector<8x128xf32>
    %214 = vector.extract_strided_slice %201 {offsets = [0, 256], sizes = [8, 128], strides = [1, 1]} : vector<8x512xf32> to vector<8x128xf32>
    %215 = math.tanh %214 : vector<8x128xf32>
    %216 = vector.extract_strided_slice %201 {offsets = [0, 384], sizes = [8, 128], strides = [1, 1]} : vector<8x512xf32> to vector<8x128xf32>
    %217 = arith.negf %216 : vector<8x128xf32>
    %218 = math.exp %217 : vector<8x128xf32>
    %cst_51 = arith.constant 1.000000e+00 : f32
    %219 = vector.broadcast %cst_51 : f32 to vector<8x128xf32>
    %220 = arith.addf %219, %218 : vector<8x128xf32>
    %221 = arith.divf %219, %220 : vector<8x128xf32>
    %222 = arith.mulf %213, %193 : vector<8x128xf32>
    %223 = arith.mulf %207, %215 : vector<8x128xf32>
    %224 = arith.addf %222, %223 : vector<8x128xf32>
    %225 = math.tanh %224 : vector<8x128xf32>
    %226 = arith.mulf %221, %225 : vector<8x128xf32>
    %c7_i32 = arith.constant 7 : i32
    %c8_i32_52 = arith.constant 8 : i32
    %227 = arith.muli %c7_i32, %c8_i32_52 : i32
    %228 = tpu.assume_multiple %227, 8 : i32
    %229 = arith.index_cast %228 : i32 to index
    %c0_53 = arith.constant 0 : index
    %230 = vector.load %arg6[%229, %c0_53] : memref<64x512xf32, #tpu.memory_space<vmem>>, vector<8x512xf32>
    %cst_54 = arith.constant dense<0.000000e+00> : vector<8x512xf32>
    %231 = tpu.matmul %226, %7, %cst_54 {dimension_numbers = #tpu.dot_dimension_numbers<[1], [0], [0], [1], [0, 0, 1, 1], [], []>} : vector<8x128xf32>, vector<128x512xf32>, vector<8x512xf32> -> vector<8x512xf32>
    %232 = arith.addf %230, %231 : vector<8x512xf32>
    %233 = vector.extract_strided_slice %232 {offsets = [0, 0], sizes = [8, 128], strides = [1, 1]} : vector<8x512xf32> to vector<8x128xf32>
    %234 = arith.negf %233 : vector<8x128xf32>
    %235 = math.exp %234 : vector<8x128xf32>
    %cst_55 = arith.constant 1.000000e+00 : f32
    %236 = vector.broadcast %cst_55 : f32 to vector<8x128xf32>
    %237 = arith.addf %236, %235 : vector<8x128xf32>
    %238 = arith.divf %236, %237 : vector<8x128xf32>
    %239 = vector.extract_strided_slice %232 {offsets = [0, 128], sizes = [8, 128], strides = [1, 1]} : vector<8x512xf32> to vector<8x128xf32>
    %240 = arith.negf %239 : vector<8x128xf32>
    %241 = math.exp %240 : vector<8x128xf32>
    %cst_56 = arith.constant 1.000000e+00 : f32
    %242 = vector.broadcast %cst_56 : f32 to vector<8x128xf32>
    %243 = arith.addf %242, %241 : vector<8x128xf32>
    %244 = arith.divf %242, %243 : vector<8x128xf32>
    %245 = vector.extract_strided_slice %232 {offsets = [0, 256], sizes = [8, 128], strides = [1, 1]} : vector<8x512xf32> to vector<8x128xf32>
    %246 = math.tanh %245 : vector<8x128xf32>
    %247 = vector.extract_strided_slice %232 {offsets = [0, 384], sizes = [8, 128], strides = [1, 1]} : vector<8x512xf32> to vector<8x128xf32>
    %248 = arith.negf %247 : vector<8x128xf32>
    %249 = math.exp %248 : vector<8x128xf32>
    %cst_57 = arith.constant 1.000000e+00 : f32
    %250 = vector.broadcast %cst_57 : f32 to vector<8x128xf32>
    %251 = arith.addf %250, %249 : vector<8x128xf32>
    %252 = arith.divf %250, %251 : vector<8x128xf32>
    %253 = arith.mulf %244, %224 : vector<8x128xf32>
    %254 = arith.mulf %238, %246 : vector<8x128xf32>
    %255 = arith.addf %253, %254 : vector<8x128xf32>
    %256 = math.tanh %255 : vector<8x128xf32>
    %257 = arith.mulf %252, %256 : vector<8x128xf32>
    %c8_i32_58 = arith.constant 8 : i32
    %c0_59 = arith.constant 0 : index
    %c0_60 = arith.constant 0 : index
    %258 = vector.load %arg5[%c0_59, %c0_60] : memref<8x128xf32, #tpu.memory_space<vmem>>, vector<8x128xf32>
    tpu.vector_store %arg5[%c0_59, %c0_60], %257 {strides = array<i32>} : memref<8x128xf32, #tpu.memory_space<vmem>>, vector<8x128xf32>,
    return
  }
  func.func @transform_0(%arg0: i32) -> (i32, i32) {
    %c0_i32 = arith.constant 0 : i32
    %c0_i32_0 = arith.constant 0 : i32
    %c0_i32_1 = arith.constant 0 : i32
    return %c0_i32, %c0_i32_0 : i32, i32
  }
  func.func @transform_1(%arg0: i32) -> (i32, i32) {
    %c0_i32 = arith.constant 0 : i32
    %c0_i32_0 = arith.constant 0 : i32
    %c0_i32_1 = arith.constant 0 : i32
    return %c0_i32, %c0_i32_0 : i32, i32
  }
  func.func @transform_2(%arg0: i32) -> (i32, i32) {
    %c0_i32 = arith.constant 0 : i32
    %c0_i32_0 = arith.constant 0 : i32
    %c0_i32_1 = arith.constant 0 : i32
    return %c0_i32, %c0_i32_0 : i32, i32
  }
  func.func @transform_3(%arg0: i32) -> (i32, i32) {
    %c0_i32 = arith.constant 0 : i32
    %c0_i32_0 = arith.constant 0 : i32
    %c0_i32_1 = arith.constant 0 : i32
    return %c0_i32, %c0_i32_0 : i32, i32
  }
  func.func @transform_4(%arg0: i32) -> (i32, i32) {
    %c0_i32 = arith.constant 0 : i32
    %c0_i32_0 = arith.constant 0 : i32
    %c0_i32_1 = arith.constant 0 : i32
    return %c0_i32, %c0_i32_0 : i32, i32
  }
}

</mosaic_0001>

<llo_original>
// kernel: cnn_title_forward.1
$region0: #{cnn_title_forward.1}
  #allocation0 [shape = 'u32[]', space=smem, size = 0x4, offset = 0x4, fixed_abs, tag = 'smem constant byte address 0x4 - core index']
  #allocation1 [shape = 'u32[144,128]{1,0:T(1,128)}', space=vmem, size = 0x12000, scoped, tag = 'internal scratch']
  #allocation2 [shape = 'f32[64,512]{1,0:T(8,128)}', space=vmem, size = 0x20000, scoped, tag = 'scratch operand']
  %s0 = inlined_call_operand.vmem [shape: f32[64,32], index: 0, kind: input, shape index: {}]
  %s1 = inlined_call_operand.vmem [shape: f32[32,512], index: 1, kind: input, shape index: {}]
  %s2 = inlined_call_operand.vmem [shape: f32[128,512], index: 2, kind: input, shape index: {}]
  %s3 = inlined_call_operand.vmem [shape: f32[1,512], index: 3, kind: input, shape index: {}]
  %s4 = inlined_call_operand.vmem [shape: f32[8,128], index: 4, kind: output, shape index: {}]
  %s5 = sld [smem:[#allocation0]]
  $region26: #{cnn_title_forward.1} parent=0
    _
  %s7 = ssub.s32 1, %s5
  %s8 = scalar_select 0, %s7, %s5
  // Predicated region
  $region2: #{cnn_title_forward.1} parent=0 // pred_check
    _
  $region3: #{cnn_title_forward.1} parent=0 // pred_check_branch
    %10 = sbr.rel (0) target = $region5
  $region4: #{cnn_title_forward.1} parent=0 // pred_region
    _
  $region5: #{cnn_title_forward.1} parent=0 // pred_fallthru
    _
  // Predicated region
  $region6: #{cnn_title_forward.1} parent=0 // pred_check
    _
  $region7: #{cnn_title_forward.1} parent=0 // pred_check_branch
    %12 = sbr.rel (0) target = $region9
  $region8: #{cnn_title_forward.1} parent=0 // pred_region
    _
  $region9: #{cnn_title_forward.1} parent=0 // pred_fallthru
    _
  // Predicated region
  $region10: #{cnn_title_forward.1} parent=0 // pred_check
    _
  $region11: #{cnn_title_forward.1} parent=0 // pred_check_branch
    %14 = sbr.rel (0) target = $region13
  $region12: #{cnn_title_forward.1} parent=0 // pred_region
    _
  $region13: #{cnn_title_forward.1} parent=0 // pred_fallthru
    _
  // Predicated region
  $region14: #{cnn_title_forward.1} parent=0 // pred_check
    _
  $region15: #{cnn_title_forward.1} parent=0 // pred_check_branch
    %16 = sbr.rel (0) target = $region17
  $region16: #{cnn_title_forward.1} parent=0 // pred_region
    _
  $region17: #{cnn_title_forward.1} parent=0 // pred_fallthru
    _
  %v17 = vld [vmem:[%s0] sm:$0xff]
  %v18 = vld [vmem:[%s0 + $0x8] sm:$0xff]
  %v19 = vld [vmem:[%s0 + $0x10] sm:$0xff]
  %v20 = vld [vmem:[%s0 + $0x18] sm:$0xff]
  %v21 = vld [vmem:[%s0 + $0x20] sm:$0xff]
  %v22 = vld [vmem:[%s0 + $0x28] sm:$0xff]
  %v23 = vld [vmem:[%s0 + $0x30] sm:$0xff]
  %v24 = vld [vmem:[%s0 + $0x38] sm:$0xff]
  %v25 = vld [vmem:[%s1] sm:$0xff]
  %v26 = vld [vmem:[%s1 + $0x8] sm:$0xff]
  %v27 = vld [vmem:[%s1 + $0x10] sm:$0xff]
  %v28 = vld [vmem:[%s1 + $0x18] sm:$0xff]
  %v29 = vld [vmem:[%s1 + $0x20] sm:$0xff]
  %v30 = vld [vmem:[%s1 + $0x28] sm:$0xff]
  %v31 = vld [vmem:[%s1 + $0x30] sm:$0xff]
  %v32 = vld [vmem:[%s1 + $0x38] sm:$0xff]
  %v33 = vld [vmem:[%s1 + $0x40] sm:$0xff]
  %v34 = vld [vmem:[%s1 + $0x48] sm:$0xff]
  %v35 = vld [vmem:[%s1 + $0x50] sm:$0xff]
  %v36 = vld [vmem:[%s1 + $0x58] sm:$0xff]
  %v37 = vld [vmem:[%s1 + $0x60] sm:$0xff]
  %v38 = vld [vmem:[%s1 + $0x68] sm:$0xff]
  %v39 = vld [vmem:[%s1 + $0x70] sm:$0xff]
  %v40 = vld [vmem:[%s1 + $0x78] sm:$0xff]
  %v41 = vld [vmem:[%s3] sm:$0xf]
  %v43 = vlaneseq
  %v44 = vshrl.u32 %v43, 7
  %v45 = vsub.s32 0, %v44
  %v46 = vrot.slane %v41, %v45
  %v47 = vlaneseq
  %v48 = vshrl.u32 %v47, 7
  %v49 = vsub.s32 1, %v48
  %v50 = vrot.slane %v41, %v49
  %v51 = vlaneseq
  %v52 = vshrl.u32 %v51, 7
  %v53 = vsub.s32 2, %v52
  %v54 = vrot.slane %v41, %v53
  %v55 = vlaneseq
  %v56 = vshrl.u32 %v55, 7
  %v57 = vsub.s32 3, %v56
  %v58 = vrot.slane %v41, %v57
  %vm63 = vcmask 261120
  %v65 = vsel %vm63, %v17, 0
  %v68 = vsel %vm63, %v18, 0
  %v71 = vsel %vm63, %v19, 0
  %v74 = vsel %vm63, %v20, 0
  %v77 = vsel %vm63, %v21, 0
  %v80 = vsel %vm63, %v22, 0
  %v83 = vsel %vm63, %v23, 0
  %v86 = vsel %vm63, %v24, 0
  %88 = vmatprep.subr.mxu0 0.0
  %89 = vmatpush1.msra.mxu0 0.0
  %90 = vmatprep.subr.mxu0 0.0
  %91 = vmatpush1.msra.mxu0 0.0
  %92 = vmatprep.subr.mxu0 0.0
  %93 = vmatpush1.msra.mxu0 0.0
  %94 = vmatprep.subr.mxu0 0.0
  %95 = vmatpush1.msra.mxu0 0.0
  %96 = vmatprep.subr.mxu0 0.0
  %97 = vmatpush1.msra.mxu0 0.0
  %98 = vmatprep.subr.mxu0 0.0
  %99 = vmatpush1.msra.mxu0 0.0
  %100 = vmatprep.subr.mxu0 0.0
  %101 = vmatpush1.msra.mxu0 0.0
  %102 = vmatprep.subr.mxu0 0.0
  %103 = vmatpush1.msra.mxu0 0.0
  %104 = vmatprep.subr.mxu0 0.0
  %105 = vmatpush1.msra.mxu0 0.0
  %106 = vmatprep.subr.mxu0 0.0
  %107 = vmatpush1.msra.mxu0 0.0
  %108 = vmatprep.subr.mxu0 0.0
  %109 = vmatpush1.msra.mxu0 0.0
  %110 = vmatprep.subr.mxu0 0.0
  %111 = vmatpush1.msra.mxu0 0.0
  %112 = vmatprep.subr.mxu0 %v38
  %113 = vmatpush1.msra.mxu0 %v37
  %114 = vmatprep.subr.mxu0 %v34
  %115 = vmatpush1.msra.mxu0 %v33
  %116 = vmatprep.subr.mxu0 %v30
  %117 = vmatpush1.msra.mxu0 %v29
  %118 = vmatprep.subr.mxu0 %v26
  %119 = vmatpush1.msra.mxu0 %v25
  %120 = vmatprep.subr.mxu0 0.0
  %121 = vmatpush2.msra.mxu0 0.0
  %122 = vmatprep.subr.mxu0 0.0
  %123 = vmatpush2.msra.mxu0 0.0
  %124 = vmatprep.subr.mxu0 0.0
  %125 = vmatpush2.msra.mxu0 0.0
  %126 = vmatprep.subr.mxu0 0.0
  %127 = vmatpush2.msra.mxu0 0.0
  %128 = vmatprep.subr.mxu0 0.0
  %129 = vmatpush2.msra.mxu0 0.0
  %130 = vmatprep.subr.mxu0 0.0
  %131 = vmatpush2.msra.mxu0 0.0
  %132 = vmatprep.subr.mxu0 0.0
  %133 = vmatpush2.msra.mxu0 0.0
  %134 = vmatprep.subr.mxu0 0.0
  %135 = vmatpush2.msra.mxu0 0.0
  %136 = vmatprep.subr.mxu0 0.0
  %137 = vmatpush2.msra.mxu0 0.0
  %138 = vmatprep.subr.mxu0 0.0
  %139 = vmatpush2.msra.mxu0 0.0
  %140 = vmatprep.subr.mxu0 0.0
  %141 = vmatpush2.msra.mxu0 0.0
  %142 = vmatprep.subr.mxu0 0.0
  %143 = vmatpush2.msra.mxu0 0.0
  %144 = vmatprep.subr.mxu0 0.0
  %145 = vmatpush2.msra.mxu0 0.0
  %146 = vmatprep.subr.mxu0 0.0
  %147 = vmatpush2.msra.mxu0 0.0
  %148 = vmatprep.subr.mxu0 0.0
  %149 = vmatpush2.msra.mxu0 0.0
  %150 = vmatprep.subr.mxu0 0.0
  %151 = vmatpush2.msra.mxu0 0.0
  %152 = vmatprep.mubr.f32.mxu0 0.0
  %153 = vmatmul.mubr.f32.gmra.mxu0 %v65
  %v154 = vpop.f32.mrf.mxu0
  %v155 = vadd.f32 %v46, %v154
  %v156 = vpop.f32.mrf.mxu0
  %v157 = vadd.f32 %v50, %v156
  %158 = vmatprep.mubr.f32.mxu0 0.0
  %159 = vmatmul.mubr.f32.gmra.mxu0 %v68
  %v160 = vpop.f32.mrf.mxu0
  %v161 = vadd.f32 %v46, %v160
  %v162 = vpop.f32.mrf.mxu0
  %v163 = vadd.f32 %v50, %v162
  %164 = vmatprep.mubr.f32.mxu0 0.0
  %165 = vmatmul.mubr.f32.gmra.mxu0 %v71
  %v166 = vpop.f32.mrf.mxu0
  %v167 = vadd.f32 %v46, %v166
  %v168 = vpop.f32.mrf.mxu0
  %v169 = vadd.f32 %v50, %v168
  %170 = vmatprep.mubr.f32.mxu0 0.0
  %171 = vmatmul.mubr.f32.gmra.mxu0 %v74
  %v172 = vpop.f32.mrf.mxu0
  %v173 = vadd.f32 %v46, %v172
  %v174 = vpop.f32.mrf.mxu0
  %v175 = vadd.f32 %v50, %v174
  %176 = vmatprep.mubr.f32.mxu0 0.0
  %177 = vmatmul.mubr.f32.gmra.mxu0 %v77
  %v178 = vpop.f32.mrf.mxu0
  %v179 = vadd.f32 %v46, %v178
  %v180 = vpop.f32.mrf.mxu0
  %v181 = vadd.f32 %v50, %v180
  %182 = vmatprep.mubr.f32.mxu0 0.0
  %183 = vmatmul.mubr.f32.gmra.mxu0 %v80
  %v184 = vpop.f32.mrf.mxu0
  %v185 = vadd.f32 %v46, %v184
  %v186 = vpop.f32.mrf.mxu0
  %v187 = vadd.f32 %v50, %v186
  %188 = vmatprep.mubr.f32.mxu0 0.0
  %189 = vmatmul.mubr.f32.gmra.mxu0 %v83
  %v190 = vpop.f32.mrf.mxu0
  %v191 = vadd.f32 %v46, %v190
  %v192 = vpop.f32.mrf.mxu0
  %v193 = vadd.f32 %v50, %v192
  %194 = vmatprep.mubr.f32.mxu0 0.0
  %195 = vmatmul.mubr.f32.gmra.mxu0 %v86
  %v196 = vpop.f32.mrf.mxu0
  %v197 = vadd.f32 %v46, %v196
  %v198 = vpop.f32.mrf.mxu0
  %v199 = vadd.f32 %v50, %v198
  %200 = vdwg.mxu0
  %201 = vmatprep.subr.mxu0 0.0
  %202 = vmatpush1.msra.mxu0 0.0
  %203 = vmatprep.subr.mxu0 0.0
  %204 = vmatpush1.msra.mxu0 0.0
  %205 = vmatprep.subr.mxu0 0.0
  %206 = vmatpush1.msra.mxu0 0.0
  %207 = vmatprep.subr.mxu0 0.0
  %208 = vmatpush1.msra.mxu0 0.0
  %209 = vmatprep.subr.mxu0 0.0
  %210 = vmatpush1.msra.mxu0 0.0
  %211 = vmatprep.subr.mxu0 0.0
  %212 = vmatpush1.msra.mxu0 0.0
  %213 = vmatprep.subr.mxu0 0.0
  %214 = vmatpush1.msra.mxu0 0.0
  %215 = vmatprep.subr.mxu0 0.0
  %216 = vmatpush1.msra.mxu0 0.0
  %217 = vmatprep.subr.mxu0 0.0
  %218 = vmatpush1.msra.mxu0 0.0
  %219 = vmatprep.subr.mxu0 0.0
  %220 = vmatpush1.msra.mxu0 0.0
  %221 = vmatprep.subr.mxu0 0.0
  %222 = vmatpush1.msra.mxu0 0.0
  %223 = vmatprep.subr.mxu0 0.0
  %224 = vmatpush1.msra.mxu0 0.0
  %225 = vmatprep.subr.mxu0 %v40
  %226 = vmatpush1.msra.mxu0 %v39
  %227 = vmatprep.subr.mxu0 %v36
  %228 = vmatpush1.msra.mxu0 %v35
  %229 = vmatprep.subr.mxu0 %v32
  %230 = vmatpush1.msra.mxu0 %v31
  %231 = vmatprep.subr.mxu0 %v28
  %232 = vmatpush1.msra.mxu0 %v27
  %233 = vmatprep.subr.mxu0 0.0
  %234 = vmatpush2.msra.mxu0 0.0
  %235 = vmatprep.subr.mxu0 0.0
  %236 = vmatpush2.msra.mxu0 0.0
  %237 = vmatprep.subr.mxu0 0.0
  %238 = vmatpush2.msra.mxu0 0.0
  %239 = vmatprep.subr.mxu0 0.0
  %240 = vmatpush2.msra.mxu0 0.0
  %241 = vmatprep.subr.mxu0 0.0
  %242 = vmatpush2.msra.mxu0 0.0
  %243 = vmatprep.subr.mxu0 0.0
  %244 = vmatpush2.msra.mxu0 0.0
  %245 = vmatprep.subr.mxu0 0.0
  %246 = vmatpush2.msra.mxu0 0.0
  %247 = vmatprep.subr.mxu0 0.0
  %248 = vmatpush2.msra.mxu0 0.0
  %249 = vmatprep.subr.mxu0 0.0
  %250 = vmatpush2.msra.mxu0 0.0
  %251 = vmatprep.subr.mxu0 0.0
  %252 = vmatpush2.msra.mxu0 0.0
  %253 = vmatprep.subr.mxu0 0.0
  %254 = vmatpush2.msra.mxu0 0.0
  %255 = vmatprep.subr.mxu0 0.0
  %256 = vmatpush2.msra.mxu0 0.0
  %257 = vmatprep.subr.mxu0 0.0
  %258 = vmatpush2.msra.mxu0 0.0
  %259 = vmatprep.subr.mxu0 0.0
  %260 = vmatpush2.msra.mxu0 0.0
  %261 = vmatprep.subr.mxu0 0.0
  %262 = vmatpush2.msra.mxu0 0.0
  %263 = vmatprep.subr.mxu0 0.0
  %264 = vmatpush2.msra.mxu0 0.0
  %265 = vmatprep.mubr.f32.mxu0 0.0
  %266 = vmatmul.mubr.f32.gmra.mxu0 %v65
  %v267 = vpop.f32.mrf.mxu0
  %v268 = vadd.f32 %v54, %v267
  %v269 = vpop.f32.mrf.mxu0
  %v270 = vadd.f32 %v58, %v269
  %271 = vmatprep.mubr.f32.mxu0 0.0
  %272 = vmatmul.mubr.f32.gmra.mxu0 %v68
  %v273 = vpop.f32.mrf.mxu0
  %v274 = vadd.f32 %v54, %v273
  %v275 = vpop.f32.mrf.mxu0
  %v276 = vadd.f32 %v58, %v275
  %277 = vmatprep.mubr.f32.mxu0 0.0
  %278 = vmatmul.mubr.f32.gmra.mxu0 %v71
  %v279 = vpop.f32.mrf.mxu0
  %v280 = vadd.f32 %v54, %v279
  %v281 = vpop.f32.mrf.mxu0
  %v282 = vadd.f32 %v58, %v281
  %283 = vmatprep.mubr.f32.mxu0 0.0
  %284 = vmatmul.mubr.f32.gmra.mxu0 %v74
  %v285 = vpop.f32.mrf.mxu0
  %v286 = vadd.f32 %v54, %v285
  %v287 = vpop.f32.mrf.mxu0
  %v288 = vadd.f32 %v58, %v287
  %289 = vmatprep.mubr.f32.mxu0 0.0
  %290 = vmatmul.mubr.f32.gmra.mxu0 %v77
  %v291 = vpop.f32.mrf.mxu0
  %v292 = vadd.f32 %v54, %v291
  %v293 = vpop.f32.mrf.mxu0
  %v294 = vadd.f32 %v58, %v293
  %295 = vmatprep.mubr.f32.mxu0 0.0
  %296 = vmatmul.mubr.f32.gmra.mxu0 %v80
  %v297 = vpop.f32.mrf.mxu0
  %v298 = vadd.f32 %v54, %v297
  %v299 = vpop.f32.mrf.mxu0
  %v300 = vadd.f32 %v58, %v299
  %301 = vmatprep.mubr.f32.mxu0 0.0
  %302 = vmatmul.mubr.f32.gmra.mxu0 %v83
  %v303 = vpop.f32.mrf.mxu0
  %v304 = vadd.f32 %v54, %v303
  %v305 = vpop.f32.mrf.mxu0
  %v306 = vadd.f32 %v58, %v305
  %307 = vmatprep.mubr.f32.mxu0 0.0
  %308 = vmatmul.mubr.f32.gmra.mxu0 %v86
  %v309 = vpop.f32.mrf.mxu0
  %v310 = vadd.f32 %v54, %v309
  %v311 = vpop.f32.mrf.mxu0
  %v312 = vadd.f32 %v58, %v311
  %313 = vdwg.mxu0
  %314 = vst [vmem:[#allocation2] sm:$0xff] %v155
  %315 = vst [vmem:[#allocation2 + $0x8] sm:$0xff] %v157
  %316 = vst [vmem:[#allocation2 + $0x10] sm:$0xff] %v268
  %317 = vst [vmem:[#allocation2 + $0x18] sm:$0xff] %v270
  %318 = vst [vmem:[#allocation2 + $0x20] sm:$0xff] %v161
  %319 = vst [vmem:[#allocation2 + $0x28] sm:$0xff] %v163
  %320 = vst [vmem:[#allocation2 + $0x30] sm:$0xff] %v274
  %321 = vst [vmem:[#allocation2 + $0x38] sm:$0xff] %v276
  %322 = vst [vmem:[#allocation2 + $0x40] sm:$0xff] %v167
  %323 = vst [vmem:[#allocation2 + $0x48] sm:$0xff] %v169
  %324 = vst [vmem:[#allocation2 + $0x50] sm:$0xff] %v280
  %325 = vst [vmem:[#allocation2 + $0x58] sm:$0xff] %v282
  %326 = vst [vmem:[#allocation2 + $0x60] sm:$0xff] %v173
  %327 = vst [vmem:[#allocation2 + $0x68] sm:$0xff] %v175
  %328 = vst [vmem:[#allocation2 + $0x70] sm:$0xff] %v286
  %329 = vst [vmem:[#allocation2 + $0x78] sm:$0xff] %v288
  %330 = vst [vmem:[#allocation2 + $0x80] sm:$0xff] %v179
  %331 = vst [vmem:[#allocation2 + $0x88] sm:$0xff] %v181
  %332 = vst [vmem:[#allocation2 + $0x90] sm:$0xff] %v292
  %333 = vst [vmem:[#allocation2 + $0x98] sm:$0xff] %v294
  %334 = vst [vmem:[#allocation2 + $0xa0] sm:$0xff] %v185
  %335 = vst [vmem:[#allocation2 + $0xa8] sm:$0xff] %v187
  %336 = vst [vmem:[#allocation2 + $0xb0] sm:$0xff] %v298
  %337 = vst [vmem:[#allocation2 + $0xb8] sm:$0xff] %v300
  %338 = vst [vmem:[#allocation2 + $0xc0] sm:$0xff] %v191
  %339 = vst [vmem:[#allocation2 + $0xc8] sm:$0xff] %v193
  %340 = vst [vmem:[#allocation2 + $0xd0] sm:$0xff] %v304
  %341 = vst [vmem:[#allocation2 + $0xd8] sm:$0xff] %v306
  %342 = vst [vmem:[#allocation2 + $0xe0] sm:$0xff] %v197
  %343 = vst [vmem:[#allocation2 + $0xe8] sm:$0xff] %v199
  %344 = vst [vmem:[#allocation2 + $0xf0] sm:$0xff] %v310
  %345 = vst [vmem:[#allocation2 + $0xf8] sm:$0xff] %v312
  %v346 = vld [vmem:[%s2] sm:$0xff]
  %v347 = vld [vmem:[%s2 + $0x8] sm:$0xff]
  %v348 = vld [vmem:[%s2 + $0x10] sm:$0xff]
  %v349 = vld [vmem:[%s2 + $0x18] sm:$0xff]
  %v350 = vld [vmem:[%s2 + $0x20] sm:$0xff]
  %v351 = vld [vmem:[%s2 + $0x28] sm:$0xff]
  %v352 = vld [vmem:[%s2 + $0x30] sm:$0xff]
  %v353 = vld [vmem:[%s2 + $0x38] sm:$0xff]
  %v354 = vld [vmem:[%s2 + $0x40] sm:$0xff]
  %v355 = vld [vmem:[%s2 + $0x48] sm:$0xff]
  %v356 = vld [vmem:[%s2 + $0x50] sm:$0xff]
  %v357 = vld [vmem:[%s2 + $0x58] sm:$0xff]
  %v358 = vld [vmem:[%s2 + $0x60] sm:$0xff]
  %v359 = vld [vmem:[%s2 + $0x68] sm:$0xff]
  %v360 = vld [vmem:[%s2 + $0x70] sm:$0xff]
  %v361 = vld [vmem:[%s2 + $0x78] sm:$0xff]
  %v362 = vld [vmem:[%s2 + $0x80] sm:$0xff]
  %v363 = vld [vmem:[%s2 + $0x88] sm:$0xff]
  %v364 = vld [vmem:[%s2 + $0x90] sm:$0xff]
  %v365 = vld [vmem:[%s2 + $0x98] sm:$0xff]
  %v366 = vld [vmem:[%s2 + $0xa0] sm:$0xff]
  %v367 = vld [vmem:[%s2 + $0xa8] sm:$0xff]
  %v368 = vld [vmem:[%s2 + $0xb0] sm:$0xff]
  %v369 = vld [vmem:[%s2 + $0xb8] sm:$0xff]
  %v370 = vld [vmem:[%s2 + $0xc0] sm:$0xff]
  %v371 = vld [vmem:[%s2 + $0xc8] sm:$0xff]
  %v372 = vld [vmem:[%s2 + $0xd0] sm:$0xff]
  %v373 = vld [vmem:[%s2 + $0xd8] sm:$0xff]
  %v374 = vld [vmem:[%s2 + $0xe0] sm:$0xff]
  %v375 = vld [vmem:[%s2 + $0xe8] sm:$0xff]
  %v376 = vld [vmem:[%s2 + $0xf0] sm:$0xff]
  %v377 = vld [vmem:[%s2 + $0xf8] sm:$0xff]
  %v378 = vld [vmem:[%s2 + $0x100] sm:$0xff]
  %v379 = vld [vmem:[%s2 + $0x108] sm:$0xff]
  %v380 = vld [vmem:[%s2 + $0x110] sm:$0xff]
  %v381 = vld [vmem:[%s2 + $0x118] sm:$0xff]
  %v382 = vld [vmem:[%s2 + $0x120] sm:$0xff]
  %v383 = vld [vmem:[%s2 + $0x128] sm:$0xff]
  %v384 = vld [vmem:[%s2 + $0x130] sm:$0xff]
  %v385 = vld [vmem:[%s2 + $0x138] sm:$0xff]
  %v386 = vld [vmem:[%s2 + $0x140] sm:$0xff]
  %v387 = vld [vmem:[%s2 + $0x148] sm:$0xff]
  %v388 = vld [vmem:[%s2 + $0x150] sm:$0xff]
  %v389 = vld [vmem:[%s2 + $0x158] sm:$0xff]
  %v390 = vld [vmem:[%s2 + $0x160] sm:$0xff]
  %v391 = vld [vmem:[%s2 + $0x168] sm:$0xff]
  %v392 = vld [vmem:[%s2 + $0x170] sm:$0xff]
  %v393 = vld [vmem:[%s2 + $0x178] sm:$0xff]
  %v394 = vld [vmem:[%s2 + $0x180] sm:$0xff]
  %v395 = vld [vmem:[%s2 + $0x188] sm:$0xff]
  %v396 = vld [vmem:[%s2 + $0x190] sm:$0xff]
  %v397 = vld [vmem:[%s2 + $0x198] sm:$0xff]
  %v398 = vld [vmem:[%s2 + $0x1a0] sm:$0xff]
  %v399 = vld [vmem:[%s2 + $0x1a8] sm:$0xff]
  %v400 = vld [vmem:[%s2 + $0x1b0] sm:$0xff]
  %v401 = vld [vmem:[%s2 + $0x1b8] sm:$0xff]
  %v402 = vld [vmem:[%s2 + $0x1c0] sm:$0xff]
  %v403 = vld [vmem:[%s2 + $0x1c8] sm:$0xff]
  %v404 = vld [vmem:[%s2 + $0x1d0] sm:$0xff]
  %v405 = vld [vmem:[%s2 + $0x1d8] sm:$0xff]
  %v406 = vld [vmem:[%s2 + $0x1e0] sm:$0xff]
  %v407 = vld [vmem:[%s2 + $0x1e8] sm:$0xff]
  %v408 = vld [vmem:[%s2 + $0x1f0] sm:$0xff]
  %v409 = vld [vmem:[%s2 + $0x1f8] sm:$0xff]
  %s410 = smul.u32 0, 4
  %s411 = smul.addr %s410, 8
  %s412 = scalar_lea.vmem [#allocation2], %s411
  %v413 = vld [vmem:[%s412] sm:$0xff]
  %v414 = vld [vmem:[%s412 + $0x8] sm:$0xff]
  %v415 = vld [vmem:[%s412 + $0x10] sm:$0xff]
  %v416 = vld [vmem:[%s412 + $0x18] sm:$0xff]
  %417 = vmatprep.subr.mxu0 %v407
  %418 = vmatpush1.msra.mxu0 %v406
  %419 = vmatprep.subr.mxu0 %v403
  %420 = vmatpush1.msra.mxu0 %v402
  %421 = vmatprep.subr.mxu0 %v399
  %422 = vmatpush1.msra.mxu0 %v398
  %423 = vmatprep.subr.mxu0 %v395
  %424 = vmatpush1.msra.mxu0 %v394
  %425 = vmatprep.subr.mxu0 %v391
  %426 = vmatpush1.msra.mxu0 %v390
  %427 = vmatprep.subr.mxu0 %v387
  %428 = vmatpush1.msra.mxu0 %v386
  %429 = vmatprep.subr.mxu0 %v383
  %430 = vmatpush1.msra.mxu0 %v382
  %431 = vmatprep.subr.mxu0 %v379
  %432 = vmatpush1.msra.mxu0 %v378
  %433 = vmatprep.subr.mxu0 %v375
  %434 = vmatpush1.msra.mxu0 %v374
  %435 = vmatprep.subr.mxu0 %v371
  %436 = vmatpush1.msra.mxu0 %v370
  %437 = vmatprep.subr.mxu0 %v367
  %438 = vmatpush1.msra.mxu0 %v366
  %439 = vmatprep.subr.mxu0 %v363
  %440 = vmatpush1.msra.mxu0 %v362
  %441 = vmatprep.subr.mxu0 %v359
  %442 = vmatpush1.msra.mxu0 %v358
  %443 = vmatprep.subr.mxu0 %v355
  %444 = vmatpush1.msra.mxu0 %v354
  %445 = vmatprep.subr.mxu0 %v351
  %446 = vmatpush1.msra.mxu0 %v350
  %447 = vmatprep.subr.mxu0 %v347
  %448 = vmatpush1.msra.mxu0 %v346
  %449 = vmatprep.subr.mxu0 0.0
  %450 = vmatpush2.msra.mxu0 0.0
  %451 = vmatprep.subr.mxu0 0.0
  %452 = vmatpush2.msra.mxu0 0.0
  %453 = vmatprep.subr.mxu0 0.0
  %454 = vmatpush2.msra.mxu0 0.0
  %455 = vmatprep.subr.mxu0 0.0
  %456 = vmatpush2.msra.mxu0 0.0
  %457 = vmatprep.subr.mxu0 0.0
  %458 = vmatpush2.msra.mxu0 0.0
  %459 = vmatprep.subr.mxu0 0.0
  %460 = vmatpush2.msra.mxu0 0.0
  %461 = vmatprep.subr.mxu0 0.0
  %462 = vmatpush2.msra.mxu0 0.0
  %463 = vmatprep.subr.mxu0 0.0
  %464 = vmatpush2.msra.mxu0 0.0
  %465 = vmatprep.subr.mxu0 0.0
  %466 = vmatpush2.msra.mxu0 0.0
  %467 = vmatprep.subr.mxu0 0.0
  %468 = vmatpush2.msra.mxu0 0.0
  %469 = vmatprep.subr.mxu0 0.0
  %470 = vmatpush2.msra.mxu0 0.0
  %471 = vmatprep.subr.mxu0 0.0
  %472 = vmatpush2.msra.mxu0 0.0
  %473 = vmatprep.subr.mxu0 0.0
  %474 = vmatpush2.msra.mxu0 0.0
  %475 = vmatprep.subr.mxu0 0.0
  %476 = vmatpush2.msra.mxu0 0.0
  %477 = vmatprep.subr.mxu0 0.0
  %478 = vmatpush2.msra.mxu0 0.0
  %479 = vmatprep.subr.mxu0 0.0
  %480 = vmatpush2.msra.mxu0 0.0
  %481 = vmatprep.mubr.f32.mxu0 0.0
  %482 = vmatmul.mubr.f32.gmra.mxu0 0.0
  %v483 = vpop.f32.mrf.mxu0
  %v484 = vadd.f32 0.0, %v483
  %v485 = vpop.f32.mrf.mxu0
  %v486 = vadd.f32 0.0, %v485
  %487 = vdwg.mxu0
  %488 = vmatprep.subr.mxu0 %v409
  %489 = vmatpush1.msra.mxu0 %v408
  %490 = vmatprep.subr.mxu0 %v405
  %491 = vmatpush1.msra.mxu0 %v404
  %492 = vmatprep.subr.mxu0 %v401
  %493 = vmatpush1.msra.mxu0 %v400
  %494 = vmatprep.subr.mxu0 %v397
  %495 = vmatpush1.msra.mxu0 %v396
  %496 = vmatprep.subr.mxu0 %v393
  %497 = vmatpush1.msra.mxu0 %v392
  %498 = vmatprep.subr.mxu0 %v389
  %499 = vmatpush1.msra.mxu0 %v388
  %500 = vmatprep.subr.mxu0 %v385
  %501 = vmatpush1.msra.mxu0 %v384
  %502 = vmatprep.subr.mxu0 %v381
  %503 = vmatpush1.msra.mxu0 %v380
  %504 = vmatprep.subr.mxu0 %v377
  %505 = vmatpush1.msra.mxu0 %v376
  %506 = vmatprep.subr.mxu0 %v373
  %507 = vmatpush1.msra.mxu0 %v372
  %508 = vmatprep.subr.mxu0 %v369
  %509 = vmatpush1.msra.mxu0 %v368
  %510 = vmatprep.subr.mxu0 %v365
  %511 = vmatpush1.msra.mxu0 %v364
  %512 = vmatprep.subr.mxu0 %v361
  %513 = vmatpush1.msra.mxu0 %v360
  %514 = vmatprep.subr.mxu0 %v357
  %515 = vmatpush1.msra.mxu0 %v356
  %516 = vmatprep.subr.mxu0 %v353
  %517 = vmatpush1.msra.mxu0 %v352
  %518 = vmatprep.subr.mxu0 %v349
  %519 = vmatpush1.msra.mxu0 %v348
  %520 = vmatprep.subr.mxu0 0.0
  %521 = vmatpush2.msra.mxu0 0.0
  %522 = vmatprep.subr.mxu0 0.0
  %523 = vmatpush2.msra.mxu0 0.0
  %524 = vmatprep.subr.mxu0 0.0
  %525 = vmatpush2.msra.mxu0 0.0
  %526 = vmatprep.subr.mxu0 0.0
  %527 = vmatpush2.msra.mxu0 0.0
  %528 = vmatprep.subr.mxu0 0.0
  %529 = vmatpush2.msra.mxu0 0.0
  %530 = vmatprep.subr.mxu0 0.0
  %531 = vmatpush2.msra.mxu0 0.0
  %532 = vmatprep.subr.mxu0 0.0
  %533 = vmatpush2.msra.mxu0 0.0
  %534 = vmatprep.subr.mxu0 0.0
  %535 = vmatpush2.msra.mxu0 0.0
  %536 = vmatprep.subr.mxu0 0.0
  %537 = vmatpush2.msra.mxu0 0.0
  %538 = vmatprep.subr.mxu0 0.0
  %539 = vmatpush2.msra.mxu0 0.0
  %540 = vmatprep.subr.mxu0 0.0
  %541 = vmatpush2.msra.mxu0 0.0
  %542 = vmatprep.subr.mxu0 0.0
  %543 = vmatpush2.msra.mxu0 0.0
  %544 = vmatprep.subr.mxu0 0.0
  %545 = vmatpush2.msra.mxu0 0.0
  %546 = vmatprep.subr.mxu0 0.0
  %547 = vmatpush2.msra.mxu0 0.0
  %548 = vmatprep.subr.mxu0 0.0
  %549 = vmatpush2.msra.mxu0 0.0
  %550 = vmatprep.subr.mxu0 0.0
  %551 = vmatpush2.msra.mxu0 0.0
  %552 = vmatprep.mubr.f32.mxu0 0.0
  %553 = vmatmul.mubr.f32.gmra.mxu0 0.0
  %v554 = vpop.f32.mrf.mxu0
  %v555 = vadd.f32 0.0, %v554
  %v556 = vpop.f32.mrf.mxu0
  %v557 = vadd.f32 0.0, %v556
  %558 = vdwg.mxu0
  %v559 = vadd.f32 %v413, %v484
  %v560 = vadd.f32 %v414, %v486
  %v561 = vadd.f32 %v415, %v555
  %v562 = vadd.f32 %v416, %v557
  %v563 = vxor.u32 %v559, 2147483648
  %v564 = vmul.f32 %v563, 1.442695
  %v565 = vpow.pop %v564
  %v566 = vadd.f32 %v565, 1.0
  %v567 = vrcp.pop %v566
  %v568 = vmul.f32 1.0, %v567
  %v569 = vxor.u32 %v560, 2147483648
  %v570 = vmul.f32 %v569, 1.442695
  %v571 = vpow.pop %v570
  %v572 = vadd.f32 %v571, 1.0
  %v573 = vrcp.pop %v572
  %v574 = vmul.f32 1.0, %v573
  %v575 = vtanh.pop %v561
  %v576 = vxor.u32 %v562, 2147483648
  %v577 = vmul.f32 %v576, 1.442695
  %v578 = vpow.pop %v577
  %v579 = vadd.f32 %v578, 1.0
  %v580 = vrcp.pop %v579
  %v581 = vmul.f32 1.0, %v580
  %v582 = vmul.f32 %v574, 0.0
  %v583 = vmul.f32 %v568, %v575
  %v584 = vadd.f32 %v582, %v583
  %v585 = vtanh.pop %v584
  %v586 = vmul.f32 %v581, %v585
  %s587 = smul.u32 1, 4
  %s588 = smul.addr %s587, 8
  %s589 = scalar_lea.vmem [#allocation2], %s588
  %v590 = vld [vmem:[%s589] sm:$0xff]
  %v591 = vld [vmem:[%s589 + $0x8] sm:$0xff]
  %v592 = vld [vmem:[%s589 + $0x10] sm:$0xff]
  %v593 = vld [vmem:[%s589 + $0x18] sm:$0xff]
  %594 = vmatprep.subr.mxu0 %v407
  %595 = vmatpush1.msra.mxu0 %v406
  %596 = vmatprep.subr.mxu0 %v403
  %597 = vmatpush1.msra.mxu0 %v402
  %598 = vmatprep.subr.mxu0 %v399
  %599 = vmatpush1.msra.mxu0 %v398
  %600 = vmatprep.subr.mxu0 %v395
  %601 = vmatpush1.msra.mxu0 %v394
  %602 = vmatprep.subr.mxu0 %v391
  %603 = vmatpush1.msra.mxu0 %v390
  %604 = vmatprep.subr.mxu0 %v387
  %605 = vmatpush1.msra.mxu0 %v386
  %606 = vmatprep.subr.mxu0 %v383
  %607 = vmatpush1.msra.mxu0 %v382
  %608 = vmatprep.subr.mxu0 %v379
  %609 = vmatpush1.msra.mxu0 %v378
  %610 = vmatprep.subr.mxu0 %v375
  %611 = vmatpush1.msra.mxu0 %v374
  %612 = vmatprep.subr.mxu0 %v371
  %613 = vmatpush1.msra.mxu0 %v370
  %614 = vmatprep.subr.mxu0 %v367
  %615 = vmatpush1.msra.mxu0 %v366
  %616 = vmatprep.subr.mxu0 %v363
  %617 = vmatpush1.msra.mxu0 %v362
  %618 = vmatprep.subr.mxu0 %v359
  %619 = vmatpush1.msra.mxu0 %v358
  %620 = vmatprep.subr.mxu0 %v355
  %621 = vmatpush1.msra.mxu0 %v354
  %622 = vmatprep.subr.mxu0 %v351
  %623 = vmatpush1.msra.mxu0 %v350
  %624 = vmatprep.subr.mxu0 %v347
  %625 = vmatpush1.msra.mxu0 %v346
  %626 = vmatprep.subr.mxu0 0.0
  %627 = vmatpush2.msra.mxu0 0.0
  %628 = vmatprep.subr.mxu0 0.0
  %629 = vmatpush2.msra.mxu0 0.0
  %630 = vmatprep.subr.mxu0 0.0
  %631 = vmatpush2.msra.mxu0 0.0
  %632 = vmatprep.subr.mxu0 0.0
  %633 = vmatpush2.msra.mxu0 0.0
  %634 = vmatprep.subr.mxu0 0.0
  %635 = vmatpush2.msra.mxu0 0.0
  %636 = vmatprep.subr.mxu0 0.0
  %637 = vmatpush2.msra.mxu0 0.0
  %638 = vmatprep.subr.mxu0 0.0
  %639 = vmatpush2.msra.mxu0 0.0
  %640 = vmatprep.subr.mxu0 0.0
  %641 = vmatpush2.msra.mxu0 0.0
  %642 = vmatprep.subr.mxu0 0.0
  %643 = vmatpush2.msra.mxu0 0.0
  %644 = vmatprep.subr.mxu0 0.0
  %645 = vmatpush2.msra.mxu0 0.0
  %646 = vmatprep.subr.mxu0 0.0
  %647 = vmatpush2.msra.mxu0 0.0
  %648 = vmatprep.subr.mxu0 0.0
  %649 = vmatpush2.msra.mxu0 0.0
  %650 = vmatprep.subr.mxu0 0.0
  %651 = vmatpush2.msra.mxu0 0.0
  %652 = vmatprep.subr.mxu0 0.0
  %653 = vmatpush2.msra.mxu0 0.0
  %654 = vmatprep.subr.mxu0 0.0
  %655 = vmatpush2.msra.mxu0 0.0
  %656 = vmatprep.subr.mxu0 0.0
  %657 = vmatpush2.msra.mxu0 0.0
  %658 = vmatprep.mubr.f32.mxu0 0.0
  %659 = vmatmul.mubr.f32.gmra.mxu0 %v586
  %v660 = vpop.f32.mrf.mxu0
  %v661 = vadd.f32 0.0, %v660
  %v662 = vpop.f32.mrf.mxu0
  %v663 = vadd.f32 0.0, %v662
  %664 = vdwg.mxu0
  %665 = vmatprep.subr.mxu0 %v409
  %666 = vmatpush1.msra.mxu0 %v408
  %667 = vmatprep.subr.mxu0 %v405
  %668 = vmatpush1.msra.mxu0 %v404
  %669 = vmatprep.subr.mxu0 %v401
  %670 = vmatpush1.msra.mxu0 %v400
  %671 = vmatprep.subr.mxu0 %v397
  %672 = vmatpush1.msra.mxu0 %v396
  %673 = vmatprep.subr.mxu0 %v393
  %674 = vmatpush1.msra.mxu0 %v392
  %675 = vmatprep.subr.mxu0 %v389
  %676 = vmatpush1.msra.mxu0 %v388
  %677 = vmatprep.subr.mxu0 %v385
  %678 = vmatpush1.msra.mxu0 %v384
  %679 = vmatprep.subr.mxu0 %v381
  %680 = vmatpush1.msra.mxu0 %v380
  %681 = vmatprep.subr.mxu0 %v377
  %682 = vmatpush1.msra.mxu0 %v376
  %683 = vmatprep.subr.mxu0 %v373
  %684 = vmatpush1.msra.mxu0 %v372
  %685 = vmatprep.subr.mxu0 %v369
  %686 = vmatpush1.msra.mxu0 %v368
  %687 = vmatprep.subr.mxu0 %v365
  %688 = vmatpush1.msra.mxu0 %v364
  %689 = vmatprep.subr.mxu0 %v361
  %690 = vmatpush1.msra.mxu0 %v360
  %691 = vmatprep.subr.mxu0 %v357
  %692 = vmatpush1.msra.mxu0 %v356
  %693 = vmatprep.subr.mxu0 %v353
  %694 = vmatpush1.msra.mxu0 %v352
  %695 = vmatprep.subr.mxu0 %v349
  %696 = vmatpush1.msra.mxu0 %v348
  %697 = vmatprep.subr.mxu0 0.0
  %698 = vmatpush2.msra.mxu0 0.0
  %699 = vmatprep.subr.mxu0 0.0
  %700 = vmatpush2.msra.mxu0 0.0
  %701 = vmatprep.subr.mxu0 0.0
  %702 = vmatpush2.msra.mxu0 0.0
  %703 = vmatprep.subr.mxu0 0.0
  %704 = vmatpush2.msra.mxu0 0.0
  %705 = vmatprep.subr.mxu0 0.0
  %706 = vmatpush2.msra.mxu0 0.0
  %707 = vmatprep.subr.mxu0 0.0
  %708 = vmatpush2.msra.mxu0 0.0
  %709 = vmatprep.subr.mxu0 0.0
  %710 = vmatpush2.msra.mxu0 0.0
  %711 = vmatprep.subr.mxu0 0.0
  %712 = vmatpush2.msra.mxu0 0.0
  %713 = vmatprep.subr.mxu0 0.0
  %714 = vmatpush2.msra.mxu0 0.0
  %715 = vmatprep.subr.mxu0 0.0
  %716 = vmatpush2.msra.mxu0 0.0
  %717 = vmatprep.subr.mxu0 0.0
  %718 = vmatpush2.msra.mxu0 0.0
  %719 = vmatprep.subr.mxu0 0.0
  %720 = vmatpush2.msra.mxu0 0.0
  %721 = vmatprep.subr.mxu0 0.0
  %722 = vmatpush2.msra.mxu0 0.0
  %723 = vmatprep.subr.mxu0 0.0
  %724 = vmatpush2.msra.mxu0 0.0
  %725 = vmatprep.subr.mxu0 0.0
  %726 = vmatpush2.msra.mxu0 0.0
  %727 = vmatprep.subr.mxu0 0.0
  %728 = vmatpush2.msra.mxu0 0.0
  %729 = vmatprep.mubr.f32.mxu0 0.0
  %730 = vmatmul.mubr.f32.gmra.mxu0 %v586
  %v731 = vpop.f32.mrf.mxu0
  %v732 = vadd.f32 0.0, %v731
  %v733 = vpop.f32.mrf.mxu0
  %v734 = vadd.f32 0.0, %v733
  %735 = vdwg.mxu0
  %v736 = vadd.f32 %v590, %v661
  %v737 = vadd.f32 %v591, %v663
  %v738 = vadd.f32 %v592, %v732
  %v739 = vadd.f32 %v593, %v734
  %v740 = vxor.u32 %v736, 2147483648
  %v741 = vmul.f32 %v740, 1.442695
  %v742 = vpow.pop %v741
  %v743 = vadd.f32 %v742, 1.0
  %v744 = vrcp.pop %v743
  %v745 = vmul.f32 1.0, %v744
  %v746 = vxor.u32 %v737, 2147483648
  %v747 = vmul.f32 %v746, 1.442695
  %v748 = vpow.pop %v747
  %v749 = vadd.f32 %v748, 1.0
  %v750 = vrcp.pop %v749
  %v751 = vmul.f32 1.0, %v750
  %v752 = vtanh.pop %v738
  %v753 = vxor.u32 %v739, 2147483648
  %v754 = vmul.f32 %v753, 1.442695
  %v755 = vpow.pop %v754
  %v756 = vadd.f32 %v755, 1.0
  %v757 = vrcp.pop %v756
  %v758 = vmul.f32 1.0, %v757
  %v759 = vmul.f32 %v751, %v584
  %v760 = vmul.f32 %v745, %v752
  %v761 = vadd.f32 %v759, %v760
  %v762 = vtanh.pop %v761
  %v763 = vmul.f32 %v758, %v762
  %s764 = smul.u32 2, 4
  %s765 = smul.addr %s764, 8
  %s766 = scalar_lea.vmem [#allocation2], %s765
  %v767 = vld [vmem:[%s766] sm:$0xff]
  %v768 = vld [vmem:[%s766 + $0x8] sm:$0xff]
  %v769 = vld [vmem:[%s766 + $0x10] sm:$0xff]
  %v770 = vld [vmem:[%s766 + $0x18] sm:$0xff]
  %771 = vmatprep.subr.mxu0 %v407
  %772 = vmatpush1.msra.mxu0 %v406
  %773 = vmatprep.subr.mxu0 %v403
  %774 = vmatpush1.msra.mxu0 %v402
  %775 = vmatprep.subr.mxu0 %v399
  %776 = vmatpush1.msra.mxu0 %v398
  %777 = vmatprep.subr.mxu0 %v395
  %778 = vmatpush1.msra.mxu0 %v394
  %779 = vmatprep.subr.mxu0 %v391
  %780 = vmatpush1.msra.mxu0 %v390
  %781 = vmatprep.subr.mxu0 %v387
  %782 = vmatpush1.msra.mxu0 %v386
  %783 = vmatprep.subr.mxu0 %v383
  %784 = vmatpush1.msra.mxu0 %v382
  %785 = vmatprep.subr.mxu0 %v379
  %786 = vmatpush1.msra.mxu0 %v378
  %787 = vmatprep.subr.mxu0 %v375
  %788 = vmatpush1.msra.mxu0 %v374
  %789 = vmatprep.subr.mxu0 %v371
  %790 = vmatpush1.msra.mxu0 %v370
  %791 = vmatprep.subr.mxu0 %v367
  %792 = vmatpush1.msra.mxu0 %v366
  %793 = vmatprep.subr.mxu0 %v363
  %794 = vmatpush1.msra.mxu0 %v362
  %795 = vmatprep.subr.mxu0 %v359
  %796 = vmatpush1.msra.mxu0 %v358
  %797 = vmatprep.subr.mxu0 %v355
  %798 = vmatpush1.msra.mxu0 %v354
  %799 = vmatprep.subr.mxu0 %v351
  %800 = vmatpush1.msra.mxu0 %v350
  %801 = vmatprep.subr.mxu0 %v347
  %802 = vmatpush1.msra.mxu0 %v346
  %803 = vmatprep.subr.mxu0 0.0
  %804 = vmatpush2.msra.mxu0 0.0
  %805 = vmatprep.subr.mxu0 0.0
  %806 = vmatpush2.msra.mxu0 0.0
  %807 = vmatprep.subr.mxu0 0.0
  %808 = vmatpush2.msra.mxu0 0.0
  %809 = vmatprep.subr.mxu0 0.0
  %810 = vmatpush2.msra.mxu0 0.0
  %811 = vmatprep.subr.mxu0 0.0
  %812 = vmatpush2.msra.mxu0 0.0
  %813 = vmatprep.subr.mxu0 0.0
  %814 = vmatpush2.msra.mxu0 0.0
  %815 = vmatprep.subr.mxu0 0.0
  %816 = vmatpush2.msra.mxu0 0.0
  %817 = vmatprep.subr.mxu0 0.0
  %818 = vmatpush2.msra.mxu0 0.0
  %819 = vmatprep.subr.mxu0 0.0
  %820 = vmatpush2.msra.mxu0 0.0
  %821 = vmatprep.subr.mxu0 0.0
  %822 = vmatpush2.msra.mxu0 0.0
  %823 = vmatprep.subr.mxu0 0.0
  %824 = vmatpush2.msra.mxu0 0.0
  %825 = vmatprep.subr.mxu0 0.0
  %826 = vmatpush2.msra.mxu0 0.0
  %827 = vmatprep.subr.mxu0 0.0
  %828 = vmatpush2.msra.mxu0 0.0
  %829 = vmatprep.subr.mxu0 0.0
  %830 = vmatpush2.msra.mxu0 0.0
  %831 = vmatprep.subr.mxu0 0.0
  %832 = vmatpush2.msra.mxu0 0.0
  %833 = vmatprep.subr.mxu0 0.0
  %834 = vmatpush2.msra.mxu0 0.0
  %835 = vmatprep.mubr.f32.mxu0 0.0
  %836 = vmatmul.mubr.f32.gmra.mxu0 %v763
  %v837 = vpop.f32.mrf.mxu0
  %v838 = vadd.f32 0.0, %v837
  %v839 = vpop.f32.mrf.mxu0
  %v840 = vadd.f32 0.0, %v839
  %841 = vdwg.mxu0
  %842 = vmatprep.subr.mxu0 %v409
  %843 = vmatpush1.msra.mxu0 %v408
  %844 = vmatprep.subr.mxu0 %v405
  %845 = vmatpush1.msra.mxu0 %v404
  %846 = vmatprep.subr.mxu0 %v401
  %847 = vmatpush1.msra.mxu0 %v400
  %848 = vmatprep.subr.mxu0 %v397
  %849 = vmatpush1.msra.mxu0 %v396
  %850 = vmatprep.subr.mxu0 %v393
  %851 = vmatpush1.msra.mxu0 %v392
  %852 = vmatprep.subr.mxu0 %v389
  %853 = vmatpush1.msra.mxu0 %v388
  %854 = vmatprep.subr.mxu0 %v385
  %855 = vmatpush1.msra.mxu0 %v384
  %856 = vmatprep.subr.mxu0 %v381
  %857 = vmatpush1.msra.mxu0 %v380
  %858 = vmatprep.subr.mxu0 %v377
  %859 = vmatpush1.msra.mxu0 %v376
  %860 = vmatprep.subr.mxu0 %v373
  %861 = vmatpush1.msra.mxu0 %v372
  %862 = vmatprep.subr.mxu0 %v369
  %863 = vmatpush1.msra.mxu0 %v368
  %864 = vmatprep.subr.mxu0 %v365
  %865 = vmatpush1.msra.mxu0 %v364
  %866 = vmatprep.subr.mxu0 %v361
  %867 = vmatpush1.msra.mxu0 %v360
  %868 = vmatprep.subr.mxu0 %v357
  %869 = vmatpush1.msra.mxu0 %v356
  %870 = vmatprep.subr.mxu0 %v353
  %871 = vmatpush1.msra.mxu0 %v352
  %872 = vmatprep.subr.mxu0 %v349
  %873 = vmatpush1.msra.mxu0 %v348
  %874 = vmatprep.subr.mxu0 0.0
  %875 = vmatpush2.msra.mxu0 0.0
  %876 = vmatprep.subr.mxu0 0.0
  %877 = vmatpush2.msra.mxu0 0.0
  %878 = vmatprep.subr.mxu0 0.0
  %879 = vmatpush2.msra.mxu0 0.0
  %880 = vmatprep.subr.mxu0 0.0
  %881 = vmatpush2.msra.mxu0 0.0
  %882 = vmatprep.subr.mxu0 0.0
  %883 = vmatpush2.msra.mxu0 0.0
  %884 = vmatprep.subr.mxu0 0.0
  %885 = vmatpush2.msra.mxu0 0.0
  %886 = vmatprep.subr.mxu0 0.0
  %887 = vmatpush2.msra.mxu0 0.0
  %888 = vmatprep.subr.mxu0 0.0
  %889 = vmatpush2.msra.mxu0 0.0
  %890 = vmatprep.subr.mxu0 0.0
  %891 = vmatpush2.msra.mxu0 0.0
  %892 = vmatprep.subr.mxu0 0.0
  %893 = vmatpush2.msra.mxu0 0.0
  %894 = vmatprep.subr.mxu0 0.0
  %895 = vmatpush2.msra.mxu0 0.0
  %896 = vmatprep.subr.mxu0 0.0
  %897 = vmatpush2.msra.mxu0 0.0
  %898 = vmatprep.subr.mxu0 0.0
  %899 = vmatpush2.msra.mxu0 0.0
  %900 = vmatprep.subr.mxu0 0.0
  %901 = vmatpush2.msra.mxu0 0.0
  %902 = vmatprep.subr.mxu0 0.0
  %903 = vmatpush2.msra.mxu0 0.0
  %904 = vmatprep.subr.mxu0 0.0
  %905 = vmatpush2.msra.mxu0 0.0
  %906 = vmatprep.mubr.f32.mxu0 0.0
  %907 = vmatmul.mubr.f32.gmra.mxu0 %v763
  %v908 = vpop.f32.mrf.mxu0
  %v909 = vadd.f32 0.0, %v908
  %v910 = vpop.f32.mrf.mxu0
  %v911 = vadd.f32 0.0, %v910
  %912 = vdwg.mxu0
  %v913 = vadd.f32 %v767, %v838
  %v914 = vadd.f32 %v768, %v840
  %v915 = vadd.f32 %v769, %v909
  %v916 = vadd.f32 %v770, %v911
  %v917 = vxor.u32 %v913, 2147483648
  %v918 = vmul.f32 %v917, 1.442695
  %v919 = vpow.pop %v918
  %v920 = vadd.f32 %v919, 1.0
  %v921 = vrcp.pop %v920
  %v922 = vmul.f32 1.0, %v921
  %v923 = vxor.u32 %v914, 2147483648
  %v924 = vmul.f32 %v923, 1.442695
  %v925 = vpow.pop %v924
  %v926 = vadd.f32 %v925, 1.0
  %v927 = vrcp.pop %v926
  %v928 = vmul.f32 1.0, %v927
  %v929 = vtanh.pop %v915
  %v930 = vxor.u32 %v916, 2147483648
  %v931 = vmul.f32 %v930, 1.442695
  %v932 = vpow.pop %v931
  %v933 = vadd.f32 %v932, 1.0
  %v934 = vrcp.pop %v933
  %v935 = vmul.f32 1.0, %v934
  %v936 = vmul.f32 %v928, %v761
  %v937 = vmul.f32 %v922, %v929
  %v938 = vadd.f32 %v936, %v937
  %v939 = vtanh.pop %v938
  %v940 = vmul.f32 %v935, %v939
  %s941 = smul.u32 3, 4
  %s942 = smul.addr %s941, 8
  %s943 = scalar_lea.vmem [#allocation2], %s942
  %v944 = vld [vmem:[%s943] sm:$0xff]
  %v945 = vld [vmem:[%s943 + $0x8] sm:$0xff]
  %v946 = vld [vmem:[%s943 + $0x10] sm:$0xff]
  %v947 = vld [vmem:[%s943 + $0x18] sm:$0xff]
  %948 = vmatprep.subr.mxu0 %v407
  %949 = vmatpush1.msra.mxu0 %v406
  %950 = vmatprep.subr.mxu0 %v403
  %951 = vmatpush1.msra.mxu0 %v402
  %952 = vmatprep.subr.mxu0 %v399
  %953 = vmatpush1.msra.mxu0 %v398
  %954 = vmatprep.subr.mxu0 %v395
  %955 = vmatpush1.msra.mxu0 %v394
  %956 = vmatprep.subr.mxu0 %v391
  %957 = vmatpush1.msra.mxu0 %v390
  %958 = vmatprep.subr.mxu0 %v387
  %959 = vmatpush1.msra.mxu0 %v386
  %960 = vmatprep.subr.mxu0 %v383
  %961 = vmatpush1.msra.mxu0 %v382
  %962 = vmatprep.subr.mxu0 %v379
  %963 = vmatpush1.msra.mxu0 %v378
  %964 = vmatprep.subr.mxu0 %v375
  %965 = vmatpush1.msra.mxu0 %v374
  %966 = vmatprep.subr.mxu0 %v371
  %967 = vmatpush1.msra.mxu0 %v370
  %968 = vmatprep.subr.mxu0 %v367
  %969 = vmatpush1.msra.mxu0 %v366
  %970 = vmatprep.subr.mxu0 %v363
  %971 = vmatpush1.msra.mxu0 %v362
  %972 = vmatprep.subr.mxu0 %v359
  %973 = vmatpush1.msra.mxu0 %v358
  %974 = vmatprep.subr.mxu0 %v355
  %975 = vmatpush1.msra.mxu0 %v354
  %976 = vmatprep.subr.mxu0 %v351
  %977 = vmatpush1.msra.mxu0 %v350
  %978 = vmatprep.subr.mxu0 %v347
  %979 = vmatpush1.msra.mxu0 %v346
  %980 = vmatprep.subr.mxu0 0.0
  %981 = vmatpush2.msra.mxu0 0.0
  %982 = vmatprep.subr.mxu0 0.0
  %983 = vmatpush2.msra.mxu0 0.0
  %984 = vmatprep.subr.mxu0 0.0
  %985 = vmatpush2.msra.mxu0 0.0
  %986 = vmatprep.subr.mxu0 0.0
  %987 = vmatpush2.msra.mxu0 0.0
  %988 = vmatprep.subr.mxu0 0.0
  %989 = vmatpush2.msra.mxu0 0.0
  %990 = vmatprep.subr.mxu0 0.0
  %991 = vmatpush2.msra.mxu0 0.0
  %992 = vmatprep.subr.mxu0 0.0
  %993 = vmatpush2.msra.mxu0 0.0
  %994 = vmatprep.subr.mxu0 0.0
  %995 = vmatpush2.msra.mxu0 0.0
  %996 = vmatprep.subr.mxu0 0.0
  %997 = vmatpush2.msra.mxu0 0.0
  %998 = vmatprep.subr.mxu0 0.0
  %999 = vmatpush2.msra.mxu0 0.0
  %1000 = vmatprep.subr.mxu0 0.0
  %1001 = vmatpush2.msra.mxu0 0.0
  %1002 = vmatprep.subr.mxu0 0.0
  %1003 = vmatpush2.msra.mxu0 0.0
  %1004 = vmatprep.subr.mxu0 0.0
  %1005 = vmatpush2.msra.mxu0 0.0
  %1006 = vmatprep.subr.mxu0 0.0
  %1007 = vmatpush2.msra.mxu0 0.0
  %1008 = vmatprep.subr.mxu0 0.0
  %1009 = vmatpush2.msra.mxu0 0.0
  %1010 = vmatprep.subr.mxu0 0.0
  %1011 = vmatpush2.msra.mxu0 0.0
  %1012 = vmatprep.mubr.f32.mxu0 0.0
  %1013 = vmatmul.mubr.f32.gmra.mxu0 %v940
  %v1014 = vpop.f32.mrf.mxu0
  %v1015 = vadd.f32 0.0, %v1014
  %v1016 = vpop.f32.mrf.mxu0
  %v1017 = vadd.f32 0.0, %v1016
  %1018 = vdwg.mxu0
  %1019 = vmatprep.subr.mxu0 %v409
  %1020 = vmatpush1.msra.mxu0 %v408
  %1021 = vmatprep.subr.mxu0 %v405
  %1022 = vmatpush1.msra.mxu0 %v404
  %1023 = vmatprep.subr.mxu0 %v401
  %1024 = vmatpush1.msra.mxu0 %v400
  %1025 = vmatprep.subr.mxu0 %v397
  %1026 = vmatpush1.msra.mxu0 %v396
  %1027 = vmatprep.subr.mxu0 %v393
  %1028 = vmatpush1.msra.mxu0 %v392
  %1029 = vmatprep.subr.mxu0 %v389
  %1030 = vmatpush1.msra.mxu0 %v388
  %1031 = vmatprep.subr.mxu0 %v385
  %1032 = vmatpush1.msra.mxu0 %v384
  %1033 = vmatprep.subr.mxu0 %v381
  %1034 = vmatpush1.msra.mxu0 %v380
  %1035 = vmatprep.subr.mxu0 %v377
  %1036 = vmatpush1.msra.mxu0 %v376
  %1037 = vmatprep.subr.mxu0 %v373
  %1038 = vmatpush1.msra.mxu0 %v372
  %1039 = vmatprep.subr.mxu0 %v369
  %1040 = vmatpush1.msra.mxu0 %v368
  %1041 = vmatprep.subr.mxu0 %v365
  %1042 = vmatpush1.msra.mxu0 %v364
  %1043 = vmatprep.subr.mxu0 %v361
  %1044 = vmatpush1.msra.mxu0 %v360
  %1045 = vmatprep.subr.mxu0 %v357
  %1046 = vmatpush1.msra.mxu0 %v356
  %1047 = vmatprep.subr.mxu0 %v353
  %1048 = vmatpush1.msra.mxu0 %v352
  %1049 = vmatprep.subr.mxu0 %v349
  %1050 = vmatpush1.msra.mxu0 %v348
  %1051 = vmatprep.subr.mxu0 0.0
  %1052 = vmatpush2.msra.mxu0 0.0
  %1053 = vmatprep.subr.mxu0 0.0
  %1054 = vmatpush2.msra.mxu0 0.0
  %1055 = vmatprep.subr.mxu0 0.0
  %1056 = vmatpush2.msra.mxu0 0.0
  %1057 = vmatprep.subr.mxu0 0.0
  %1058 = vmatpush2.msra.mxu0 0.0
  %1059 = vmatprep.subr.mxu0 0.0
  %1060 = vmatpush2.msra.mxu0 0.0
  %1061 = vmatprep.subr.mxu0 0.0
  %1062 = vmatpush2.msra.mxu0 0.0
  %1063 = vmatprep.subr.mxu0 0.0
  %1064 = vmatpush2.msra.mxu0 0.0
  %1065 = vmatprep.subr.mxu0 0.0
  %1066 = vmatpush2.msra.mxu0 0.0
  %1067 = vmatprep.subr.mxu0 0.0
  %1068 = vmatpush2.msra.mxu0 0.0
  %1069 = vmatprep.subr.mxu0 0.0
  %1070 = vmatpush2.msra.mxu0 0.0
  %1071 = vmatprep.subr.mxu0 0.0
  %1072 = vmatpush2.msra.mxu0 0.0
  %1073 = vmatprep.subr.mxu0 0.0
  %1074 = vmatpush2.msra.mxu0 0.0
  %1075 = vmatprep.subr.mxu0 0.0
  %1076 = vmatpush2.msra.mxu0 0.0
  %1077 = vmatprep.subr.mxu0 0.0
  %1078 = vmatpush2.msra.mxu0 0.0
  %1079 = vmatprep.subr.mxu0 0.0
  %1080 = vmatpush2.msra.mxu0 0.0
  %1081 = vmatprep.subr.mxu0 0.0
  %1082 = vmatpush2.msra.mxu0 0.0
  %1083 = vmatprep.mubr.f32.mxu0 0.0
  %1084 = vmatmul.mubr.f32.gmra.mxu0 %v940
  %v1085 = vpop.f32.mrf.mxu0
  %v1086 = vadd.f32 0.0, %v1085
  %v1087 = vpop.f32.mrf.mxu0
  %v1088 = vadd.f32 0.0, %v1087
  %1089 = vdwg.mxu0
  %v1090 = vadd.f32 %v944, %v1015
  %v1091 = vadd.f32 %v945, %v1017
  %v1092 = vadd.f32 %v946, %v1086
  %v1093 = vadd.f32 %v947, %v1088
  %v1094 = vxor.u32 %v1090, 2147483648
  %v1095 = vmul.f32 %v1094, 1.442695
  %v1096 = vpow.pop %v1095
  %v1097 = vadd.f32 %v1096, 1.0
  %v1098 = vrcp.pop %v1097
  %v1099 = vmul.f32 1.0, %v1098
  %v1100 = vxor.u32 %v1091, 2147483648
  %v1101 = vmul.f32 %v1100, 1.442695
  %v1102 = vpow.pop %v1101
  %v1103 = vadd.f32 %v1102, 1.0
  %v1104 = vrcp.pop %v1103
  %v1105 = vmul.f32 1.0, %v1104
  %v1106 = vtanh.pop %v1092
  %v1107 = vxor.u32 %v1093, 2147483648
  %v1108 = vmul.f32 %v1107, 1.442695
  %v1109 = vpow.pop %v1108
  %v1110 = vadd.f32 %v1109, 1.0
  %v1111 = vrcp.pop %v1110
  %v1112 = vmul.f32 1.0, %v1111
  %v1113 = vmul.f32 %v1105, %v938
  %v1114 = vmul.f32 %v1099, %v1106
  %v1115 = vadd.f32 %v1113, %v1114
  %v1116 = vtanh.pop %v1115
  %v1117 = vmul.f32 %v1112, %v1116
  %s1118 = smul.u32 4, 4
  %s1119 = smul.addr %s1118, 8
  %s1120 = scalar_lea.vmem [#allocation2], %s1119
  %v1121 = vld [vmem:[%s1120] sm:$0xff]
  %v1122 = vld [vmem:[%s1120 + $0x8] sm:$0xff]
  %v1123 = vld [vmem:[%s1120 + $0x10] sm:$0xff]
  %v1124 = vld [vmem:[%s1120 + $0x18] sm:$0xff]
  %1125 = vmatprep.subr.mxu0 %v407
  %1126 = vmatpush1.msra.mxu0 %v406
  %1127 = vmatprep.subr.mxu0 %v403
  %1128 = vmatpush1.msra.mxu0 %v402
  %1129 = vmatprep.subr.mxu0 %v399
  %1130 = vmatpush1.msra.mxu0 %v398
  %1131 = vmatprep.subr.mxu0 %v395
  %1132 = vmatpush1.msra.mxu0 %v394
  %1133 = vmatprep.subr.mxu0 %v391
  %1134 = vmatpush1.msra.mxu0 %v390
  %1135 = vmatprep.subr.mxu0 %v387
  %1136 = vmatpush1.msra.mxu0 %v386
  %1137 = vmatprep.subr.mxu0 %v383
  %1138 = vmatpush1.msra.mxu0 %v382
  %1139 = vmatprep.subr.mxu0 %v379
  %1140 = vmatpush1.msra.mxu0 %v378
  %1141 = vmatprep.subr.mxu0 %v375
  %1142 = vmatpush1.msra.mxu0 %v374
  %1143 = vmatprep.subr.mxu0 %v371
  %1144 = vmatpush1.msra.mxu0 %v370
  %1145 = vmatprep.subr.mxu0 %v367
  %1146 = vmatpush1.msra.mxu0 %v366
  %1147 = vmatprep.subr.mxu0 %v363
  %1148 = vmatpush1.msra.mxu0 %v362
  %1149 = vmatprep.subr.mxu0 %v359
  %1150 = vmatpush1.msra.mxu0 %v358
  %1151 = vmatprep.subr.mxu0 %v355
  %1152 = vmatpush1.msra.mxu0 %v354
  %1153 = vmatprep.subr.mxu0 %v351
  %1154 = vmatpush1.msra.mxu0 %v350
  %1155 = vmatprep.subr.mxu0 %v347
  %1156 = vmatpush1.msra.mxu0 %v346
  %1157 = vmatprep.subr.mxu0 0.0
  %1158 = vmatpush2.msra.mxu0 0.0
  %1159 = vmatprep.subr.mxu0 0.0
  %1160 = vmatpush2.msra.mxu0 0.0
  %1161 = vmatprep.subr.mxu0 0.0
  %1162 = vmatpush2.msra.mxu0 0.0
  %1163 = vmatprep.subr.mxu0 0.0
  %1164 = vmatpush2.msra.mxu0 0.0
  %1165 = vmatprep.subr.mxu0 0.0
  %1166 = vmatpush2.msra.mxu0 0.0
  %1167 = vmatprep.subr.mxu0 0.0
  %1168 = vmatpush2.msra.mxu0 0.0
  %1169 = vmatprep.subr.mxu0 0.0
  %1170 = vmatpush2.msra.mxu0 0.0
  %1171 = vmatprep.subr.mxu0 0.0
  %1172 = vmatpush2.msra.mxu0 0.0
  %1173 = vmatprep.subr.mxu0 0.0
  %1174 = vmatpush2.msra.mxu0 0.0
  %1175 = vmatprep.subr.mxu0 0.0
  %1176 = vmatpush2.msra.mxu0 0.0
  %1177 = vmatprep.subr.mxu0 0.0
  %1178 = vmatpush2.msra.mxu0 0.0
  %1179 = vmatprep.subr.mxu0 0.0
  %1180 = vmatpush2.msra.mxu0 0.0
  %1181 = vmatprep.subr.mxu0 0.0
  %1182 = vmatpush2.msra.mxu0 0.0
  %1183 = vmatprep.subr.mxu0 0.0
  %1184 = vmatpush2.msra.mxu0 0.0
  %1185 = vmatprep.subr.mxu0 0.0
  %1186 = vmatpush2.msra.mxu0 0.0
  %1187 = vmatprep.subr.mxu0 0.0
  %1188 = vmatpush2.msra.mxu0 0.0
  %1189 = vmatprep.mubr.f32.mxu0 0.0
  %1190 = vmatmul.mubr.f32.gmra.mxu0 %v1117
  %v1191 = vpop.f32.mrf.mxu0
  %v1192 = vadd.f32 0.0, %v1191
  %v1193 = vpop.f32.mrf.mxu0
  %v1194 = vadd.f32 0.0, %v1193
  %1195 = vdwg.mxu0
  %1196 = vmatprep.subr.mxu0 %v409
  %1197 = vmatpush1.msra.mxu0 %v408
  %1198 = vmatprep.subr.mxu0 %v405
  %1199 = vmatpush1.msra.mxu0 %v404
  %1200 = vmatprep.subr.mxu0 %v401
  %1201 = vmatpush1.msra.mxu0 %v400
  %1202 = vmatprep.subr.mxu0 %v397
  %1203 = vmatpush1.msra.mxu0 %v396
  %1204 = vmatprep.subr.mxu0 %v393
  %1205 = vmatpush1.msra.mxu0 %v392
  %1206 = vmatprep.subr.mxu0 %v389
  %1207 = vmatpush1.msra.mxu0 %v388
  %1208 = vmatprep.subr.mxu0 %v385
  %1209 = vmatpush1.msra.mxu0 %v384
  %1210 = vmatprep.subr.mxu0 %v381
  %1211 = vmatpush1.msra.mxu0 %v380
  %1212 = vmatprep.subr.mxu0 %v377
  %1213 = vmatpush1.msra.mxu0 %v376
  %1214 = vmatprep.subr.mxu0 %v373
  %1215 = vmatpush1.msra.mxu0 %v372
  %1216 = vmatprep.subr.mxu0 %v369
  %1217 = vmatpush1.msra.mxu0 %v368
  %1218 = vmatprep.subr.mxu0 %v365
  %1219 = vmatpush1.msra.mxu0 %v364
  %1220 = vmatprep.subr.mxu0 %v361
  %1221 = vmatpush1.msra.mxu0 %v360
  %1222 = vmatprep.subr.mxu0 %v357
  %1223 = vmatpush1.msra.mxu0 %v356
  %1224 = vmatprep.subr.mxu0 %v353
  %1225 = vmatpush1.msra.mxu0 %v352
  %1226 = vmatprep.subr.mxu0 %v349
  %1227 = vmatpush1.msra.mxu0 %v348
  %1228 = vmatprep.subr.mxu0 0.0
  %1229 = vmatpush2.msra.mxu0 0.0
  %1230 = vmatprep.subr.mxu0 0.0
  %1231 = vmatpush2.msra.mxu0 0.0
  %1232 = vmatprep.subr.mxu0 0.0
  %1233 = vmatpush2.msra.mxu0 0.0
  %1234 = vmatprep.subr.mxu0 0.0
  %1235 = vmatpush2.msra.mxu0 0.0
  %1236 = vmatprep.subr.mxu0 0.0
  %1237 = vmatpush2.msra.mxu0 0.0
  %1238 = vmatprep.subr.mxu0 0.0
  %1239 = vmatpush2.msra.mxu0 0.0
  %1240 = vmatprep.subr.mxu0 0.0
  %1241 = vmatpush2.msra.mxu0 0.0
  %1242 = vmatprep.subr.mxu0 0.0
  %1243 = vmatpush2.msra.mxu0 0.0
  %1244 = vmatprep.subr.mxu0 0.0
  %1245 = vmatpush2.msra.mxu0 0.0
  %1246 = vmatprep.subr.mxu0 0.0
  %1247 = vmatpush2.msra.mxu0 0.0
  %1248 = vmatprep.subr.mxu0 0.0
  %1249 = vmatpush2.msra.mxu0 0.0
  %1250 = vmatprep.subr.mxu0 0.0
  %1251 = vmatpush2.msra.mxu0 0.0
  %1252 = vmatprep.subr.mxu0 0.0
  %1253 = vmatpush2.msra.mxu0 0.0
  %1254 = vmatprep.subr.mxu0 0.0
  %1255 = vmatpush2.msra.mxu0 0.0
  %1256 = vmatprep.subr.mxu0 0.0
  %1257 = vmatpush2.msra.mxu0 0.0
  %1258 = vmatprep.subr.mxu0 0.0
  %1259 = vmatpush2.msra.mxu0 0.0
  %1260 = vmatprep.mubr.f32.mxu0 0.0
  %1261 = vmatmul.mubr.f32.gmra.mxu0 %v1117
  %v1262 = vpop.f32.mrf.mxu0
  %v1263 = vadd.f32 0.0, %v1262
  %v1264 = vpop.f32.mrf.mxu0
  %v1265 = vadd.f32 0.0, %v1264
  %1266 = vdwg.mxu0
  %v1267 = vadd.f32 %v1121, %v1192
  %v1268 = vadd.f32 %v1122, %v1194
  %v1269 = vadd.f32 %v1123, %v1263
  %v1270 = vadd.f32 %v1124, %v1265
  %v1271 = vxor.u32 %v1267, 2147483648
  %v1272 = vmul.f32 %v1271, 1.442695
  %v1273 = vpow.pop %v1272
  %v1274 = vadd.f32 %v1273, 1.0
  %v1275 = vrcp.pop %v1274
  %v1276 = vmul.f32 1.0, %v1275
  %v1277 = vxor.u32 %v1268, 2147483648
  %v1278 = vmul.f32 %v1277, 1.442695
  %v1279 = vpow.pop %v1278
  %v1280 = vadd.f32 %v1279, 1.0
  %v1281 = vrcp.pop %v1280
  %v1282 = vmul.f32 1.0, %v1281
  %v1283 = vtanh.pop %v1269
  %v1284 = vxor.u32 %v1270, 2147483648
  %v1285 = vmul.f32 %v1284, 1.442695
  %v1286 = vpow.pop %v1285
  %v1287 = vadd.f32 %v1286, 1.0
  %v1288 = vrcp.pop %v1287
  %v1289 = vmul.f32 1.0, %v1288
  %v1290 = vmul.f32 %v1282, %v1115
  %v1291 = vmul.f32 %v1276, %v1283
  %v1292 = vadd.f32 %v1290, %v1291
  %v1293 = vtanh.pop %v1292
  %v1294 = vmul.f32 %v1289, %v1293
  %s1295 = smul.u32 5, 4
  %s1296 = smul.addr %s1295, 8
  %s1297 = scalar_lea.vmem [#allocation2], %s1296
  %v1298 = vld [vmem:[%s1297] sm:$0xff]
  %v1299 = vld [vmem:[%s1297 + $0x8] sm:$0xff]
  %v1300 = vld [vmem:[%s1297 + $0x10] sm:$0xff]
  %v1301 = vld [vmem:[%s1297 + $0x18] sm:$0xff]
  %1302 = vmatprep.subr.mxu0 %v407
  %1303 = vmatpush1.msra.mxu0 %v406
  %1304 = vmatprep.subr.mxu0 %v403
  %1305 = vmatpush1.msra.mxu0 %v402
  %1306 = vmatprep.subr.mxu0 %v399
  %1307 = vmatpush1.msra.mxu0 %v398
  %1308 = vmatprep.subr.mxu0 %v395
  %1309 = vmatpush1.msra.mxu0 %v394
  %1310 = vmatprep.subr.mxu0 %v391
  %1311 = vmatpush1.msra.mxu0 %v390
  %1312 = vmatprep.subr.mxu0 %v387
  %1313 = vmatpush1.msra.mxu0 %v386
  %1314 = vmatprep.subr.mxu0 %v383
  %1315 = vmatpush1.msra.mxu0 %v382
  %1316 = vmatprep.subr.mxu0 %v379
  %1317 = vmatpush1.msra.mxu0 %v378
  %1318 = vmatprep.subr.mxu0 %v375
  %1319 = vmatpush1.msra.mxu0 %v374
  %1320 = vmatprep.subr.mxu0 %v371
  %1321 = vmatpush1.msra.mxu0 %v370
  %1322 = vmatprep.subr.mxu0 %v367
  %1323 = vmatpush1.msra.mxu0 %v366
  %1324 = vmatprep.subr.mxu0 %v363
  %1325 = vmatpush1.msra.mxu0 %v362
  %1326 = vmatprep.subr.mxu0 %v359
  %1327 = vmatpush1.msra.mxu0 %v358
  %1328 = vmatprep.subr.mxu0 %v355
  %1329 = vmatpush1.msra.mxu0 %v354
  %1330 = vmatprep.subr.mxu0 %v351
  %1331 = vmatpush1.msra.mxu0 %v350
  %1332 = vmatprep.subr.mxu0 %v347
  %1333 = vmatpush1.msra.mxu0 %v346
  %1334 = vmatprep.subr.mxu0 0.0
  %1335 = vmatpush2.msra.mxu0 0.0
  %1336 = vmatprep.subr.mxu0 0.0
  %1337 = vmatpush2.msra.mxu0 0.0
  %1338 = vmatprep.subr.mxu0 0.0
  %1339 = vmatpush2.msra.mxu0 0.0
  %1340 = vmatprep.subr.mxu0 0.0
  %1341 = vmatpush2.msra.mxu0 0.0
  %1342 = vmatprep.subr.mxu0 0.0
  %1343 = vmatpush2.msra.mxu0 0.0
  %1344 = vmatprep.subr.mxu0 0.0
  %1345 = vmatpush2.msra.mxu0 0.0
  %1346 = vmatprep.subr.mxu0 0.0
  %1347 = vmatpush2.msra.mxu0 0.0
  %1348 = vmatprep.subr.mxu0 0.0
  %1349 = vmatpush2.msra.mxu0 0.0
  %1350 = vmatprep.subr.mxu0 0.0
  %1351 = vmatpush2.msra.mxu0 0.0
  %1352 = vmatprep.subr.mxu0 0.0
  %1353 = vmatpush2.msra.mxu0 0.0
  %1354 = vmatprep.subr.mxu0 0.0
  %1355 = vmatpush2.msra.mxu0 0.0
  %1356 = vmatprep.subr.mxu0 0.0
  %1357 = vmatpush2.msra.mxu0 0.0
  %1358 = vmatprep.subr.mxu0 0.0
  %1359 = vmatpush2.msra.mxu0 0.0
  %1360 = vmatprep.subr.mxu0 0.0
  %1361 = vmatpush2.msra.mxu0 0.0
  %1362 = vmatprep.subr.mxu0 0.0
  %1363 = vmatpush2.msra.mxu0 0.0
  %1364 = vmatprep.subr.mxu0 0.0
  %1365 = vmatpush2.msra.mxu0 0.0
  %1366 = vmatprep.mubr.f32.mxu0 0.0
  %1367 = vmatmul.mubr.f32.gmra.mxu0 %v1294
  %v1368 = vpop.f32.mrf.mxu0
  %v1369 = vadd.f32 0.0, %v1368
  %v1370 = vpop.f32.mrf.mxu0
  %v1371 = vadd.f32 0.0, %v1370
  %1372 = vdwg.mxu0
  %1373 = vmatprep.subr.mxu0 %v409
  %1374 = vmatpush1.msra.mxu0 %v408
  %1375 = vmatprep.subr.mxu0 %v405
  %1376 = vmatpush1.msra.mxu0 %v404
  %1377 = vmatprep.subr.mxu0 %v401
  %1378 = vmatpush1.msra.mxu0 %v400
  %1379 = vmatprep.subr.mxu0 %v397
  %1380 = vmatpush1.msra.mxu0 %v396
  %1381 = vmatprep.subr.mxu0 %v393
  %1382 = vmatpush1.msra.mxu0 %v392
  %1383 = vmatprep.subr.mxu0 %v389
  %1384 = vmatpush1.msra.mxu0 %v388
  %1385 = vmatprep.subr.mxu0 %v385
  %1386 = vmatpush1.msra.mxu0 %v384
  %1387 = vmatprep.subr.mxu0 %v381
  %1388 = vmatpush1.msra.mxu0 %v380
  %1389 = vmatprep.subr.mxu0 %v377
  %1390 = vmatpush1.msra.mxu0 %v376
  %1391 = vmatprep.subr.mxu0 %v373
  %1392 = vmatpush1.msra.mxu0 %v372
  %1393 = vmatprep.subr.mxu0 %v369
  %1394 = vmatpush1.msra.mxu0 %v368
  %1395 = vmatprep.subr.mxu0 %v365
  %1396 = vmatpush1.msra.mxu0 %v364
  %1397 = vmatprep.subr.mxu0 %v361
  %1398 = vmatpush1.msra.mxu0 %v360
  %1399 = vmatprep.subr.mxu0 %v357
  %1400 = vmatpush1.msra.mxu0 %v356
  %1401 = vmatprep.subr.mxu0 %v353
  %1402 = vmatpush1.msra.mxu0 %v352
  %1403 = vmatprep.subr.mxu0 %v349
  %1404 = vmatpush1.msra.mxu0 %v348
  %1405 = vmatprep.subr.mxu0 0.0
  %1406 = vmatpush2.msra.mxu0 0.0
  %1407 = vmatprep.subr.mxu0 0.0
  %1408 = vmatpush2.msra.mxu0 0.0
  %1409 = vmatprep.subr.mxu0 0.0
  %1410 = vmatpush2.msra.mxu0 0.0
  %1411 = vmatprep.subr.mxu0 0.0
  %1412 = vmatpush2.msra.mxu0 0.0
  %1413 = vmatprep.subr.mxu0 0.0
  %1414 = vmatpush2.msra.mxu0 0.0
  %1415 = vmatprep.subr.mxu0 0.0
  %1416 = vmatpush2.msra.mxu0 0.0
  %1417 = vmatprep.subr.mxu0 0.0
  %1418 = vmatpush2.msra.mxu0 0.0
  %1419 = vmatprep.subr.mxu0 0.0
  %1420 = vmatpush2.msra.mxu0 0.0
  %1421 = vmatprep.subr.mxu0 0.0
  %1422 = vmatpush2.msra.mxu0 0.0
  %1423 = vmatprep.subr.mxu0 0.0
  %1424 = vmatpush2.msra.mxu0 0.0
  %1425 = vmatprep.subr.mxu0 0.0
  %1426 = vmatpush2.msra.mxu0 0.0
  %1427 = vmatprep.subr.mxu0 0.0
  %1428 = vmatpush2.msra.mxu0 0.0
  %1429 = vmatprep.subr.mxu0 0.0
  %1430 = vmatpush2.msra.mxu0 0.0
  %1431 = vmatprep.subr.mxu0 0.0
  %1432 = vmatpush2.msra.mxu0 0.0
  %1433 = vmatprep.subr.mxu0 0.0
  %1434 = vmatpush2.msra.mxu0 0.0
  %1435 = vmatprep.subr.mxu0 0.0
  %1436 = vmatpush2.msra.mxu0 0.0
  %1437 = vmatprep.mubr.f32.mxu0 0.0
  %1438 = vmatmul.mubr.f32.gmra.mxu0 %v1294
  %v1439 = vpop.f32.mrf.mxu0
  %v1440 = vadd.f32 0.0, %v1439
  %v1441 = vpop.f32.mrf.mxu0
  %v1442 = vadd.f32 0.0, %v1441
  %1443 = vdwg.mxu0
  %v1444 = vadd.f32 %v1298, %v1369
  %v1445 = vadd.f32 %v1299, %v1371
  %v1446 = vadd.f32 %v1300, %v1440
  %v1447 = vadd.f32 %v1301, %v1442
  %v1448 = vxor.u32 %v1444, 2147483648
  %v1449 = vmul.f32 %v1448, 1.442695
  %v1450 = vpow.pop %v1449
  %v1451 = vadd.f32 %v1450, 1.0
  %v1452 = vrcp.pop %v1451
  %v1453 = vmul.f32 1.0, %v1452
  %v1454 = vxor.u32 %v1445, 2147483648
  %v1455 = vmul.f32 %v1454, 1.442695
  %v1456 = vpow.pop %v1455
  %v1457 = vadd.f32 %v1456, 1.0
  %v1458 = vrcp.pop %v1457
  %v1459 = vmul.f32 1.0, %v1458
  %v1460 = vtanh.pop %v1446
  %v1461 = vxor.u32 %v1447, 2147483648
  %v1462 = vmul.f32 %v1461, 1.442695
  %v1463 = vpow.pop %v1462
  %v1464 = vadd.f32 %v1463, 1.0
  %v1465 = vrcp.pop %v1464
  %v1466 = vmul.f32 1.0, %v1465
  %v1467 = vmul.f32 %v1459, %v1292
  %v1468 = vmul.f32 %v1453, %v1460
  %v1469 = vadd.f32 %v1467, %v1468
  %v1470 = vtanh.pop %v1469
  %v1471 = vmul.f32 %v1466, %v1470
  %s1472 = smul.u32 6, 4
  %s1473 = smul.addr %s1472, 8
  %s1474 = scalar_lea.vmem [#allocation2], %s1473
  %v1475 = vld [vmem:[%s1474] sm:$0xff]
  %v1476 = vld [vmem:[%s1474 + $0x8] sm:$0xff]
  %v1477 = vld [vmem:[%s1474 + $0x10] sm:$0xff]
  %v1478 = vld [vmem:[%s1474 + $0x18] sm:$0xff]
  %1479 = vmatprep.subr.mxu0 %v407
  %1480 = vmatpush1.msra.mxu0 %v406
  %1481 = vmatprep.subr.mxu0 %v403
  %1482 = vmatpush1.msra.mxu0 %v402
  %1483 = vmatprep.subr.mxu0 %v399
  %1484 = vmatpush1.msra.mxu0 %v398
  %1485 = vmatprep.subr.mxu0 %v395
  %1486 = vmatpush1.msra.mxu0 %v394
  %1487 = vmatprep.subr.mxu0 %v391
  %1488 = vmatpush1.msra.mxu0 %v390
  %1489 = vmatprep.subr.mxu0 %v387
  %1490 = vmatpush1.msra.mxu0 %v386
  %1491 = vmatprep.subr.mxu0 %v383
  %1492 = vmatpush1.msra.mxu0 %v382
  %1493 = vmatprep.subr.mxu0 %v379
  %1494 = vmatpush1.msra.mxu0 %v378
  %1495 = vmatprep.subr.mxu0 %v375
  %1496 = vmatpush1.msra.mxu0 %v374
  %1497 = vmatprep.subr.mxu0 %v371
  %1498 = vmatpush1.msra.mxu0 %v370
  %1499 = vmatprep.subr.mxu0 %v367
  %1500 = vmatpush1.msra.mxu0 %v366
  %1501 = vmatprep.subr.mxu0 %v363
  %1502 = vmatpush1.msra.mxu0 %v362
  %1503 = vmatprep.subr.mxu0 %v359
  %1504 = vmatpush1.msra.mxu0 %v358
  %1505 = vmatprep.subr.mxu0 %v355
  %1506 = vmatpush1.msra.mxu0 %v354
  %1507 = vmatprep.subr.mxu0 %v351
  %1508 = vmatpush1.msra.mxu0 %v350
  %1509 = vmatprep.subr.mxu0 %v347
  %1510 = vmatpush1.msra.mxu0 %v346
  %1511 = vmatprep.subr.mxu0 0.0
  %1512 = vmatpush2.msra.mxu0 0.0
  %1513 = vmatprep.subr.mxu0 0.0
  %1514 = vmatpush2.msra.mxu0 0.0
  %1515 = vmatprep.subr.mxu0 0.0
  %1516 = vmatpush2.msra.mxu0 0.0
  %1517 = vmatprep.subr.mxu0 0.0
  %1518 = vmatpush2.msra.mxu0 0.0
  %1519 = vmatprep.subr.mxu0 0.0
  %1520 = vmatpush2.msra.mxu0 0.0
  %1521 = vmatprep.subr.mxu0 0.0
  %1522 = vmatpush2.msra.mxu0 0.0
  %1523 = vmatprep.subr.mxu0 0.0
  %1524 = vmatpush2.msra.mxu0 0.0
  %1525 = vmatprep.subr.mxu0 0.0
  %1526 = vmatpush2.msra.mxu0 0.0
  %1527 = vmatprep.subr.mxu0 0.0
  %1528 = vmatpush2.msra.mxu0 0.0
  %1529 = vmatprep.subr.mxu0 0.0
  %1530 = vmatpush2.msra.mxu0 0.0
  %1531 = vmatprep.subr.mxu0 0.0
  %1532 = vmatpush2.msra.mxu0 0.0
  %1533 = vmatprep.subr.mxu0 0.0
  %1534 = vmatpush2.msra.mxu0 0.0
  %1535 = vmatprep.subr.mxu0 0.0
  %1536 = vmatpush2.msra.mxu0 0.0
  %1537 = vmatprep.subr.mxu0 0.0
  %1538 = vmatpush2.msra.mxu0 0.0
  %1539 = vmatprep.subr.mxu0 0.0
  %1540 = vmatpush2.msra.mxu0 0.0
  %1541 = vmatprep.subr.mxu0 0.0
  %1542 = vmatpush2.msra.mxu0 0.0
  %1543 = vmatprep.mubr.f32.mxu0 0.0
  %1544 = vmatmul.mubr.f32.gmra.mxu0 %v1471
  %v1545 = vpop.f32.mrf.mxu0
  %v1546 = vadd.f32 0.0, %v1545
  %v1547 = vpop.f32.mrf.mxu0
  %v1548 = vadd.f32 0.0, %v1547
  %1549 = vdwg.mxu0
  %1550 = vmatprep.subr.mxu0 %v409
  %1551 = vmatpush1.msra.mxu0 %v408
  %1552 = vmatprep.subr.mxu0 %v405
  %1553 = vmatpush1.msra.mxu0 %v404
  %1554 = vmatprep.subr.mxu0 %v401
  %1555 = vmatpush1.msra.mxu0 %v400
  %1556 = vmatprep.subr.mxu0 %v397
  %1557 = vmatpush1.msra.mxu0 %v396
  %1558 = vmatprep.subr.mxu0 %v393
  %1559 = vmatpush1.msra.mxu0 %v392
  %1560 = vmatprep.subr.mxu0 %v389
  %1561 = vmatpush1.msra.mxu0 %v388
  %1562 = vmatprep.subr.mxu0 %v385
  %1563 = vmatpush1.msra.mxu0 %v384
  %1564 = vmatprep.subr.mxu0 %v381
  %1565 = vmatpush1.msra.mxu0 %v380
  %1566 = vmatprep.subr.mxu0 %v377
  %1567 = vmatpush1.msra.mxu0 %v376
  %1568 = vmatprep.subr.mxu0 %v373
  %1569 = vmatpush1.msra.mxu0 %v372
  %1570 = vmatprep.subr.mxu0 %v369
  %1571 = vmatpush1.msra.mxu0 %v368
  %1572 = vmatprep.subr.mxu0 %v365
  %1573 = vmatpush1.msra.mxu0 %v364
  %1574 = vmatprep.subr.mxu0 %v361
  %1575 = vmatpush1.msra.mxu0 %v360
  %1576 = vmatprep.subr.mxu0 %v357
  %1577 = vmatpush1.msra.mxu0 %v356
  %1578 = vmatprep.subr.mxu0 %v353
  %1579 = vmatpush1.msra.mxu0 %v352
  %1580 = vmatprep.subr.mxu0 %v349
  %1581 = vmatpush1.msra.mxu0 %v348
  %1582 = vmatprep.subr.mxu0 0.0
  %1583 = vmatpush2.msra.mxu0 0.0
  %1584 = vmatprep.subr.mxu0 0.0
  %1585 = vmatpush2.msra.mxu0 0.0
  %1586 = vmatprep.subr.mxu0 0.0
  %1587 = vmatpush2.msra.mxu0 0.0
  %1588 = vmatprep.subr.mxu0 0.0
  %1589 = vmatpush2.msra.mxu0 0.0
  %1590 = vmatprep.subr.mxu0 0.0
  %1591 = vmatpush2.msra.mxu0 0.0
  %1592 = vmatprep.subr.mxu0 0.0
  %1593 = vmatpush2.msra.mxu0 0.0
  %1594 = vmatprep.subr.mxu0 0.0
  %1595 = vmatpush2.msra.mxu0 0.0
  %1596 = vmatprep.subr.mxu0 0.0
  %1597 = vmatpush2.msra.mxu0 0.0
  %1598 = vmatprep.subr.mxu0 0.0
  %1599 = vmatpush2.msra.mxu0 0.0
  %1600 = vmatprep.subr.mxu0 0.0
  %1601 = vmatpush2.msra.mxu0 0.0
  %1602 = vmatprep.subr.mxu0 0.0
  %1603 = vmatpush2.msra.mxu0 0.0
  %1604 = vmatprep.subr.mxu0 0.0
  %1605 = vmatpush2.msra.mxu0 0.0
  %1606 = vmatprep.subr.mxu0 0.0
  %1607 = vmatpush2.msra.mxu0 0.0
  %1608 = vmatprep.subr.mxu0 0.0
  %1609 = vmatpush2.msra.mxu0 0.0
  %1610 = vmatprep.subr.mxu0 0.0
  %1611 = vmatpush2.msra.mxu0 0.0
  %1612 = vmatprep.subr.mxu0 0.0
  %1613 = vmatpush2.msra.mxu0 0.0
  %1614 = vmatprep.mubr.f32.mxu0 0.0
  %1615 = vmatmul.mubr.f32.gmra.mxu0 %v1471
  %v1616 = vpop.f32.mrf.mxu0
  %v1617 = vadd.f32 0.0, %v1616
  %v1618 = vpop.f32.mrf.mxu0
  %v1619 = vadd.f32 0.0, %v1618
  %1620 = vdwg.mxu0
  %v1621 = vadd.f32 %v1475, %v1546
  %v1622 = vadd.f32 %v1476, %v1548
  %v1623 = vadd.f32 %v1477, %v1617
  %v1624 = vadd.f32 %v1478, %v1619
  %v1625 = vxor.u32 %v1621, 2147483648
  %v1626 = vmul.f32 %v1625, 1.442695
  %v1627 = vpow.pop %v1626
  %v1628 = vadd.f32 %v1627, 1.0
  %v1629 = vrcp.pop %v1628
  %v1630 = vmul.f32 1.0, %v1629
  %v1631 = vxor.u32 %v1622, 2147483648
  %v1632 = vmul.f32 %v1631, 1.442695
  %v1633 = vpow.pop %v1632
  %v1634 = vadd.f32 %v1633, 1.0
  %v1635 = vrcp.pop %v1634
  %v1636 = vmul.f32 1.0, %v1635
  %v1637 = vtanh.pop %v1623
  %v1638 = vxor.u32 %v1624, 2147483648
  %v1639 = vmul.f32 %v1638, 1.442695
  %v1640 = vpow.pop %v1639
  %v1641 = vadd.f32 %v1640, 1.0
  %v1642 = vrcp.pop %v1641
  %v1643 = vmul.f32 1.0, %v1642
  %v1644 = vmul.f32 %v1636, %v1469
  %v1645 = vmul.f32 %v1630, %v1637
  %v1646 = vadd.f32 %v1644, %v1645
  %v1647 = vtanh.pop %v1646
  %v1648 = vmul.f32 %v1643, %v1647
  %s1649 = smul.u32 7, 4
  %s1650 = smul.addr %s1649, 8
  %s1651 = scalar_lea.vmem [#allocation2], %s1650
  %v1652 = vld [vmem:[%s1651] sm:$0xff]
  %v1653 = vld [vmem:[%s1651 + $0x8] sm:$0xff]
  %v1654 = vld [vmem:[%s1651 + $0x10] sm:$0xff]
  %v1655 = vld [vmem:[%s1651 + $0x18] sm:$0xff]
  %1656 = vmatprep.subr.mxu0 %v407
  %1657 = vmatpush1.msra.mxu0 %v406
  %1658 = vmatprep.subr.mxu0 %v403
  %1659 = vmatpush1.msra.mxu0 %v402
  %1660 = vmatprep.subr.mxu0 %v399
  %1661 = vmatpush1.msra.mxu0 %v398
  %1662 = vmatprep.subr.mxu0 %v395
  %1663 = vmatpush1.msra.mxu0 %v394
  %1664 = vmatprep.subr.mxu0 %v391
  %1665 = vmatpush1.msra.mxu0 %v390
  %1666 = vmatprep.subr.mxu0 %v387
  %1667 = vmatpush1.msra.mxu0 %v386
  %1668 = vmatprep.subr.mxu0 %v383
  %1669 = vmatpush1.msra.mxu0 %v382
  %1670 = vmatprep.subr.mxu0 %v379
  %1671 = vmatpush1.msra.mxu0 %v378
  %1672 = vmatprep.subr.mxu0 %v375
  %1673 = vmatpush1.msra.mxu0 %v374
  %1674 = vmatprep.subr.mxu0 %v371
  %1675 = vmatpush1.msra.mxu0 %v370
  %1676 = vmatprep.subr.mxu0 %v367
  %1677 = vmatpush1.msra.mxu0 %v366
  %1678 = vmatprep.subr.mxu0 %v363
  %1679 = vmatpush1.msra.mxu0 %v362
  %1680 = vmatprep.subr.mxu0 %v359
  %1681 = vmatpush1.msra.mxu0 %v358
  %1682 = vmatprep.subr.mxu0 %v355
  %1683 = vmatpush1.msra.mxu0 %v354
  %1684 = vmatprep.subr.mxu0 %v351
  %1685 = vmatpush1.msra.mxu0 %v350
  %1686 = vmatprep.subr.mxu0 %v347
  %1687 = vmatpush1.msra.mxu0 %v346
  %1688 = vmatprep.subr.mxu0 0.0
  %1689 = vmatpush2.msra.mxu0 0.0
  %1690 = vmatprep.subr.mxu0 0.0
  %1691 = vmatpush2.msra.mxu0 0.0
  %1692 = vmatprep.subr.mxu0 0.0
  %1693 = vmatpush2.msra.mxu0 0.0
  %1694 = vmatprep.subr.mxu0 0.0
  %1695 = vmatpush2.msra.mxu0 0.0
  %1696 = vmatprep.subr.mxu0 0.0
  %1697 = vmatpush2.msra.mxu0 0.0
  %1698 = vmatprep.subr.mxu0 0.0
  %1699 = vmatpush2.msra.mxu0 0.0
  %1700 = vmatprep.subr.mxu0 0.0
  %1701 = vmatpush2.msra.mxu0 0.0
  %1702 = vmatprep.subr.mxu0 0.0
  %1703 = vmatpush2.msra.mxu0 0.0
  %1704 = vmatprep.subr.mxu0 0.0
  %1705 = vmatpush2.msra.mxu0 0.0
  %1706 = vmatprep.subr.mxu0 0.0
  %1707 = vmatpush2.msra.mxu0 0.0
  %1708 = vmatprep.subr.mxu0 0.0
  %1709 = vmatpush2.msra.mxu0 0.0
  %1710 = vmatprep.subr.mxu0 0.0
  %1711 = vmatpush2.msra.mxu0 0.0
  %1712 = vmatprep.subr.mxu0 0.0
  %1713 = vmatpush2.msra.mxu0 0.0
  %1714 = vmatprep.subr.mxu0 0.0
  %1715 = vmatpush2.msra.mxu0 0.0
  %1716 = vmatprep.subr.mxu0 0.0
  %1717 = vmatpush2.msra.mxu0 0.0
  %1718 = vmatprep.subr.mxu0 0.0
  %1719 = vmatpush2.msra.mxu0 0.0
  %1720 = vmatprep.mubr.f32.mxu0 0.0
  %1721 = vmatmul.mubr.f32.gmra.mxu0 %v1648
  %v1722 = vpop.f32.mrf.mxu0
  %v1723 = vadd.f32 0.0, %v1722
  %v1724 = vpop.f32.mrf.mxu0
  %v1725 = vadd.f32 0.0, %v1724
  %1726 = vdwg.mxu0
  %1727 = vmatprep.subr.mxu0 %v409
  %1728 = vmatpush1.msra.mxu0 %v408
  %1729 = vmatprep.subr.mxu0 %v405
  %1730 = vmatpush1.msra.mxu0 %v404
  %1731 = vmatprep.subr.mxu0 %v401
  %1732 = vmatpush1.msra.mxu0 %v400
  %1733 = vmatprep.subr.mxu0 %v397
  %1734 = vmatpush1.msra.mxu0 %v396
  %1735 = vmatprep.subr.mxu0 %v393
  %1736 = vmatpush1.msra.mxu0 %v392
  %1737 = vmatprep.subr.mxu0 %v389
  %1738 = vmatpush1.msra.mxu0 %v388
  %1739 = vmatprep.subr.mxu0 %v385
  %1740 = vmatpush1.msra.mxu0 %v384
  %1741 = vmatprep.subr.mxu0 %v381
  %1742 = vmatpush1.msra.mxu0 %v380
  %1743 = vmatprep.subr.mxu0 %v377
  %1744 = vmatpush1.msra.mxu0 %v376
  %1745 = vmatprep.subr.mxu0 %v373
  %1746 = vmatpush1.msra.mxu0 %v372
  %1747 = vmatprep.subr.mxu0 %v369
  %1748 = vmatpush1.msra.mxu0 %v368
  %1749 = vmatprep.subr.mxu0 %v365
  %1750 = vmatpush1.msra.mxu0 %v364
  %1751 = vmatprep.subr.mxu0 %v361
  %1752 = vmatpush1.msra.mxu0 %v360
  %1753 = vmatprep.subr.mxu0 %v357
  %1754 = vmatpush1.msra.mxu0 %v356
  %1755 = vmatprep.subr.mxu0 %v353
  %1756 = vmatpush1.msra.mxu0 %v352
  %1757 = vmatprep.subr.mxu0 %v349
  %1758 = vmatpush1.msra.mxu0 %v348
  %1759 = vmatprep.subr.mxu0 0.0
  %1760 = vmatpush2.msra.mxu0 0.0
  %1761 = vmatprep.subr.mxu0 0.0
  %1762 = vmatpush2.msra.mxu0 0.0
  %1763 = vmatprep.subr.mxu0 0.0
  %1764 = vmatpush2.msra.mxu0 0.0
  %1765 = vmatprep.subr.mxu0 0.0
  %1766 = vmatpush2.msra.mxu0 0.0
  %1767 = vmatprep.subr.mxu0 0.0
  %1768 = vmatpush2.msra.mxu0 0.0
  %1769 = vmatprep.subr.mxu0 0.0
  %1770 = vmatpush2.msra.mxu0 0.0
  %1771 = vmatprep.subr.mxu0 0.0
  %1772 = vmatpush2.msra.mxu0 0.0
  %1773 = vmatprep.subr.mxu0 0.0
  %1774 = vmatpush2.msra.mxu0 0.0
  %1775 = vmatprep.subr.mxu0 0.0
  %1776 = vmatpush2.msra.mxu0 0.0
  %1777 = vmatprep.subr.mxu0 0.0
  %1778 = vmatpush2.msra.mxu0 0.0
  %1779 = vmatprep.subr.mxu0 0.0
  %1780 = vmatpush2.msra.mxu0 0.0
  %1781 = vmatprep.subr.mxu0 0.0
  %1782 = vmatpush2.msra.mxu0 0.0
  %1783 = vmatprep.subr.mxu0 0.0
  %1784 = vmatpush2.msra.mxu0 0.0
  %1785 = vmatprep.subr.mxu0 0.0
  %1786 = vmatpush2.msra.mxu0 0.0
  %1787 = vmatprep.subr.mxu0 0.0
  %1788 = vmatpush2.msra.mxu0 0.0
  %1789 = vmatprep.subr.mxu0 0.0
  %1790 = vmatpush2.msra.mxu0 0.0
  %1791 = vmatprep.mubr.f32.mxu0 0.0
  %1792 = vmatmul.mubr.f32.gmra.mxu0 %v1648
  %v1793 = vpop.f32.mrf.mxu0
  %v1794 = vadd.f32 0.0, %v1793
  %v1795 = vpop.f32.mrf.mxu0
  %v1796 = vadd.f32 0.0, %v1795
  %1797 = vdwg.mxu0
  %v1798 = vadd.f32 %v1652, %v1723
  %v1799 = vadd.f32 %v1653, %v1725
  %v1800 = vadd.f32 %v1654, %v1794
  %v1801 = vadd.f32 %v1655, %v1796
  %v1802 = vxor.u32 %v1798, 2147483648
  %v1803 = vmul.f32 %v1802, 1.442695
  %v1804 = vpow.pop %v1803
  %v1805 = vadd.f32 %v1804, 1.0
  %v1806 = vrcp.pop %v1805
  %v1807 = vmul.f32 1.0, %v1806
  %v1808 = vxor.u32 %v1799, 2147483648
  %v1809 = vmul.f32 %v1808, 1.442695
  %v1810 = vpow.pop %v1809
  %v1811 = vadd.f32 %v1810, 1.0
  %v1812 = vrcp.pop %v1811
  %v1813 = vmul.f32 1.0, %v1812
  %v1814 = vtanh.pop %v1800
  %v1815 = vxor.u32 %v1801, 2147483648
  %v1816 = vmul.f32 %v1815, 1.442695
  %v1817 = vpow.pop %v1816
  %v1818 = vadd.f32 %v1817, 1.0
  %v1819 = vrcp.pop %v1818
  %v1820 = vmul.f32 1.0, %v1819
  %v1821 = vmul.f32 %v1813, %v1646
  %v1822 = vmul.f32 %v1807, %v1814
  %v1823 = vadd.f32 %v1821, %v1822
  %v1824 = vtanh.pop %v1823
  %v1825 = vmul.f32 %v1820, %v1824
  %1826 = vst [vmem:[%s4] sm:$0xff] %v1825
  // Predicated region
  $region18: #{cnn_title_forward.1} parent=0 // pred_check
    _
  $region19: #{cnn_title_forward.1} parent=0 // pred_check_branch
    %1828 = sbr.rel (0) target = $region21
  $region20: #{cnn_title_forward.1} parent=0 // pred_region
    _
  $region21: #{cnn_title_forward.1} parent=0 // pred_fallthru
    _
  // Predicated region
  $region22: #{cnn_title_forward.1} parent=0 // pred_check
    _
  $region23: #{cnn_title_forward.1} parent=0 // pred_check_branch
    %1830 = sbr.rel (0) target = $region25
  $region24: #{cnn_title_forward.1} parent=0 // pred_region
    _
  $region25: #{cnn_title_forward.1} parent=0 // pred_fallthru
    _

</llo_original>
